<compile_context>
chip_gen: v6e
topology: v6e:2x2x1
jax: 0.10.0
libtpu: 0.0.40
codegen_flags: <defaults>
</compile_context>

<pallas_src>
import functools

import jax
import jax.numpy as jnp
from jax import lax
from jax.experimental import pallas as pl
from jax.experimental.pallas import tpu as pltpu


def _round_up(x, m):
    return ((x + m - 1) // m) * m


def _cdiv(a, b):
    return -(-a // b)


def _rnn_fc_kernel(chunk_full, chunk_last, num_chunks, batch_tile,
                   xfirst_ref, xnext_ref, wih_ref, whh_ref, brnn_ref,
                   wfc_ref, bfc_ref, h0_ref,
                   out_ref, hfin_ref,
                   xw_ref, h_ref):
    i = pl.program_id(1)                       # chunk index (serial "arbitrary" axis)
    hp = whh_ref.shape[-1]
    rows = chunk_full * batch_tile             # rows per ping-pong projection slot

    # Unroll policy (review): full unroll only for short chunks.
    unroll_full = True if chunk_full <= 16 else 8
    unroll_last = True if chunk_last <= 16 else 8

    # --- chunk-0 bootstrap: reset the h carry, bulk-project the first chunk into slot 0.
    @pl.when(i == 0)
    def _():
        h_ref[...] = h0_ref[...]
        xw_ref[pl.ds(0, rows), :] = (
            jnp.dot(xfirst_ref[...], wih_ref[...],
                    preferred_element_type=jnp.float32)
            + brnn_ref[...])

    # Loop-invariant operands hoisted out of the recurrence loop (incl. the bias
    # broadcast, which JAX does not CSE).
    w_hh = whh_ref[...]
    w_ih = wih_ref[...]
    b_rnn = jnp.broadcast_to(brnn_ref[...], (batch_tile, hp))

    read_base = (i % 2) * rows                 # slot holding chunk i's projection
    write_base = ((i + 1) % 2) * rows          # slot receiving chunk i+1's projection

    def run_chunk(n_steps, unroll, project_next):
        def step(t, h):
            off = t * batch_tile
            # Latency-critical serial recurrence: h <- tanh(xw_t + h @ W_hh).
            x_t = xw_ref[pl.ds(pl.multiple_of(read_base + off, batch_tile),
                               batch_tile), :]
            h_new = jnp.tanh(x_t + jnp.dot(h, w_hh,
                                           preferred_element_type=jnp.float32))
            if project_next:
                # Off-critical-path: project one timestep of the NEXT chunk into the
                # other ping-pong slot (fills MXU slots idle behind the serial chain).
                x_nxt = xnext_ref[pl.ds(pl.multiple_of(off, batch_tile),
                                        batch_tile), :]
                xw_ref[pl.ds(pl.multiple_of(write_base + off, batch_tile),
                             batch_tile), :] = (
                    jnp.dot(x_nxt, w_ih, preferred_element_type=jnp.float32) + b_rnn)
            return h_new

        h_ref[...] = lax.fori_loop(0, n_steps, step, h_ref[...], unroll=unroll)

    # Middle chunks: recurrence over chunk i + look-ahead projection of chunk i+1.
    @pl.when(i < num_chunks - 1)
    def _():
        run_chunk(chunk_full, unroll_full, project_next=True)

    # Last chunk: recurrence only (no next chunk), then fc + ModifiedReLU05.
    @pl.when(i == num_chunks - 1)
    def _():
        run_chunk(chunk_last, unroll_last, project_next=False)
        h_final = h_ref[...]
        hfin_ref[...] = h_final
        logits = (jnp.dot(h_final, wfc_ref[...],
                          preferred_element_type=jnp.float32)
                  + bfc_ref[...])
        out_ref[...] = jnp.minimum(jnp.maximum(logits, 0.0), 5.0)


def group_recommendation_rnn_forward(embedded, params, hidden=None, *,
                                     chunk_timesteps=128, batch_tile_rows=128,
                                     project_in_bf16=False):
    """embedded: (batch, seq, emb) float32.  Returns (output, hidden) matching PyTorch."""
    B, S, E = embedded.shape
    H = params["w_hh"].shape[0]
    V = params["w_fc"].shape[0]

    # Lane/sublane-dense padded sizes.
    Hp = _round_up(H, 128)
    Vp = _round_up(V, 128)
    Bp = max(_round_up(B, 8), 8)
    Bt = max(8, min(_round_up(batch_tile_rows, 8), Bp))   # rows per batch tile
    n_bt = _cdiv(Bp, Bt)
    Bp = n_bt * Bt

    # Time chunking: VMEM stays O(chunk), not O(seq_len).
    C = max(1, min(chunk_timesteps, S))
    nc = _cdiv(S, C)
    C_last = S - (nc - 1) * C                  # static length of the last chunk
    S_pad = nc * C

    # Off-critical-path projection may optionally run in bf16 (gated on numerics).
    in_dtype = jnp.bfloat16 if project_in_bf16 else jnp.float32

    # Time-major, batch-tiled layout: (n_bt, S_pad*Bt, E); each chunk of a tile is a
    # contiguous (C*Bt, E) block, so both the bulk and per-step projections are
    # aligned sublane slices.
    x = jnp.transpose(embedded.astype(in_dtype), (1, 0, 2))          # (S, B, E)
    x = jnp.pad(x, ((0, S_pad - S), (0, Bp - B), (0, 0)))            # (S_pad, Bp, E)
    x = x.reshape(S_pad, n_bt, Bt, E).transpose(1, 0, 2, 3)          # (n_bt, S_pad, Bt, E)
    x = x.reshape(n_bt, S_pad * Bt, E)
    x_first = x[:, : C * Bt, :]                                      # chunk 0 per tile

    if hidden is None:
        h0 = jnp.zeros((n_bt, Bt, Hp), jnp.float32)
    else:
        h0 = jnp.pad(hidden.reshape(B, H).astype(jnp.float32),
                     ((0, Bp - B), (0, Hp - H))).reshape(n_bt, Bt, Hp)

    # Pre-transpose weights to (in, out); zero-pad hidden/vocab dims to 128 lanes.
    # Zero padding keeps padded hidden lanes exactly 0 through the recurrence.
    w_ih = jnp.pad(params["w_ih"].T.astype(in_dtype), ((0, 0), (0, Hp - H)))          # (E, Hp)
    w_hh = jnp.pad(params["w_hh"].T.astype(jnp.float32), ((0, Hp - H), (0, Hp - H)))  # (Hp, Hp)
    w_fc = jnp.pad(params["w_fc"].T.astype(jnp.float32), ((0, Hp - H), (0, Vp - V)))  # (Hp, Vp)
    b_rnn = jnp.pad((params["b_ih"] + params["b_hh"]).reshape(1, H).astype(jnp.float32),
                    ((0, 0), (0, Hp - H)))                                            # (1, Hp)
    b_fc = jnp.pad(params["b_fc"].reshape(1, V).astype(jnp.float32),
                   ((0, 0), (0, Vp - V)))                                             # (1, Vp)

    # --- BlockSpecs: batch-tile axis parallel, chunk axis serial ("arbitrary"). ---
    def tile3(r, c):
        return pl.BlockSpec((None, r, c), lambda b, i: (b, 0, 0))

    def full2(arr):
        return pl.BlockSpec(arr.shape, lambda b, i: (0, 0))

    # Look-ahead chunk: at step i Pallas fetches chunk i+1 (clamped); chunk 0 comes
    # from the small resident x_first block.
    x_next_spec = pl.BlockSpec((None, C * Bt, E),
                               lambda b, i: (b, jnp.minimum(i + 1, nc - 1), 0))

    grid_spec = pltpu.PrefetchScalarGridSpec(
        num_scalar_prefetch=0,
        grid=(n_bt, nc),
        in_specs=[tile3(C * Bt, E),            # x_first (chunk 0 of this tile)
                  x_next_spec,                 # x (look-ahead chunk of this tile)
                  full2(w_ih), full2(w_hh), full2(b_rnn),
                  full2(w_fc), full2(b_fc),
                  tile3(Bt, Hp)],              # h0
        out_specs=(tile3(Bt, Vp), tile3(Bt, Hp)),
        scratch_shapes=[pltpu.VMEM((2 * C * Bt, Hp), jnp.float32),   # ping-pong xw
                        pltpu.VMEM((Bt, Hp), jnp.float32)])          # h carry

    # Explicit VMEM budget (review): derived from the chunked working set, capped so the
    # same kernel fits v7x's 64 MiB per-TC VMEM.
    itemsize = 2 if project_in_bf16 else 4
    est_vmem = (3 * C * Bt * E * itemsize                 # x_first + double-buffered x chunk
                + E * Hp * itemsize                       # w_ih
                + (Hp * Hp + Hp + Hp * Vp + Vp) * 4       # w_hh, b_rnn, w_fc, b_fc
                + 2 * Bt * Hp * 4                         # h0 block (double-buffered)
                + 2 * (Bt * Vp + Bt * Hp) * 4             # outputs (double-buffered)
                + (2 * C * Bt + Bt) * Hp * 4)             # scratch
    vmem_limit = int(min(64 * 1024 * 1024, max(32 * 1024 * 1024, 2 * est_vmem)))

    flops = 2 * S * Bp * E * Hp + 2 * S * Bp * Hp * Hp + 2 * Bp * Hp * Vp
    bytes_accessed = ((x.size + x_first.size) * itemsize
                      + E * Hp * itemsize
                      + (Hp * Hp + Hp + Hp * Vp + Vp) * 4
                      + h0.size * 4
                      + n_bt * Bt * (Vp + Hp) * 4)
    cost = pl.CostEstimate(flops=flops, transcendentals=S * Bp * Hp,
                           bytes_accessed=bytes_accessed)

    out_p, h_p = pl.pallas_call(
        functools.partial(_rnn_fc_kernel, C, C_last, nc, Bt),
        grid_spec=grid_spec,
        out_shape=(jax.ShapeDtypeStruct((n_bt, Bt, Vp), jnp.float32),
                   jax.ShapeDtypeStruct((n_bt, Bt, Hp), jnp.float32)),
        compiler_params=pltpu.CompilerParams(
            dimension_semantics=("parallel", "arbitrary"),
            vmem_limit_bytes=vmem_limit),
        cost_estimate=cost,
    )(x_first, x, w_ih, w_hh, b_rnn, w_fc, b_fc, h0)

    out = out_p.reshape(Bp, Vp)[:B, :V]
    h_final = h_p.reshape(Bp, Hp)[:B, :H]

    hidden_out = h_final.reshape(1, B, H)      # nn.RNN hidden: (num_layers=1, B, H)

    # PyTorch: fc(hidden) -> (1, B, V); .squeeze(0) -> (B, V); 2nd .squeeze(0) drops only if B == 1.
    output = out if B != 1 else out[0]
    return output, hidden_out


def _reference_forward(embedded, params, hidden=None):
    B, S, E = embedded.shape
    H = params["w_hh"].shape[0]
    h = jnp.zeros((B, H), jnp.float32) if hidden is None else hidden.reshape(B, H)
    for t in range(S):
        h = jnp.tanh(embedded[:, t, :] @ params["w_ih"].T + params["b_ih"]
                     + h @ params["w_hh"].T + params["b_hh"])
    logits = h @ params["w_fc"].T + params["b_fc"]
    out = jnp.minimum(jnp.maximum(logits, 0.0), 5.0)
    out = out if B != 1 else out[0]
    return out, h.reshape(1, B, H)


if __name__ == "__main__":
    # Small shapes consistent with the module.
    vocab_size, embedding_dim, hidden_dim = 32, 16, 32
    batch, seq = 2, 8

    key = jax.random.PRNGKey(0)
    k = jax.random.split(key, 8)

    # Deterministic parameter init (PyTorch default: U(-1/sqrt(H), 1/sqrt(H))).
    bnd_rnn = 1.0 / jnp.sqrt(hidden_dim)
    bnd_fc = 1.0 / jnp.sqrt(hidden_dim)
    params = {
        "w_ih": jax.random.uniform(k[0], (hidden_dim, embedding_dim), jnp.float32, -bnd_rnn, bnd_rnn),
        "w_hh": jax.random.uniform(k[1], (hidden_dim, hidden_dim), jnp.float32, -bnd_rnn, bnd_rnn),
        "b_ih": jax.random.uniform(k[2], (hidden_dim,), jnp.float32, -bnd_rnn, bnd_rnn),
        "b_hh": jax.random.uniform(k[3], (hidden_dim,), jnp.float32, -bnd_rnn, bnd_rnn),
        "w_fc": jax.random.uniform(k[4], (vocab_size, hidden_dim), jnp.float32, -bnd_fc, bnd_fc),
        "b_fc": jax.random.uniform(k[5], (vocab_size,), jnp.float32, -bnd_fc, bnd_fc),
    }

    embedded = jax.random.normal(k[6], (batch, seq, embedding_dim), jnp.float32)

    # --- Test 1: default (single chunk, single batch tile) + explicit-hidden path. ---
    out, hidden = group_recommendation_rnn_forward(embedded, params)
    out = jax.block_until_ready(out)
    hidden = jax.block_until_ready(hidden)

    ref_out, ref_hidden = _reference_forward(embedded, params)
    assert out.shape == (batch, vocab_size)
    assert hidden.shape == (1, batch, hidden_dim)
    assert jnp.allclose(out, ref_out, atol=1e-5, rtol=1e-5)
    assert jnp.allclose(hidden, ref_hidden, atol=1e-5, rtol=1e-5)

    out2, hidden2 = group_recommendation_rnn_forward(embedded, params, hidden=hidden)
    ref_out2, ref_hidden2 = _reference_forward(embedded, params, hidden=ref_hidden)
    out2 = jax.block_until_ready(out2)
    assert jnp.allclose(out2, ref_out2, atol=1e-5, rtol=1e-5)
    assert jnp.allclose(hidden2, ref_hidden2, atol=1e-5, rtol=1e-5)

    # --- Test 2: force multiple time chunks with a partial last chunk (C=3 -> 3,3,2). ---
    out3, hidden3 = group_recommendation_rnn_forward(embedded, params, chunk_timesteps=3)
    out3 = jax.block_until_ready(out3)
    assert jnp.allclose(out3, ref_out, atol=1e-5, rtol=1e-5)
    assert jnp.allclose(hidden3, ref_hidden, atol=1e-5, rtol=1e-5)

    # --- Test 3: multiple batch tiles (parallel grid axis) + multiple chunks. ---
    batch_big = 10
    embedded_big = jax.random.normal(k[7], (batch_big, seq, embedding_dim), jnp.float32)
    out4, hidden4 = group_recommendation_rnn_forward(
        embedded_big, params, chunk_timesteps=3, batch_tile_rows=8)
    out4 = jax.block_until_ready(out4)
    ref_out4, ref_hidden4 = _reference_forward(embedded_big, params)
    assert out4.shape == (batch_big, vocab_size)
    assert jnp.allclose(out4, ref_out4, atol=1e-5, rtol=1e-5)
    assert jnp.allclose(hidden4, ref_hidden4, atol=1e-5, rtol=1e-5)

    print("KERNEL_OK")
</pallas_src>

<mosaic_0001>
module attributes {stable_mosaic.version = 11 : i64} {
  func.func @_rnn_fc_kernel(%arg0: i32, %arg1: i32, %arg2: memref<1x64x16xf32, #tpu.memory_space<vmem>>, %arg3: memref<1x64x16xf32, #tpu.memory_space<vmem>>, %arg4: memref<16x128xf32, #tpu.memory_space<vmem>>, %arg5: memref<128x128xf32, #tpu.memory_space<vmem>>, %arg6: memref<1x128xf32, #tpu.memory_space<vmem>>, %arg7: memref<128x128xf32, #tpu.memory_space<vmem>>, %arg8: memref<1x128xf32, #tpu.memory_space<vmem>>, %arg9: memref<1x8x128xf32, #tpu.memory_space<vmem>>, %arg10: memref<1x8x128xf32, #tpu.memory_space<vmem>>, %arg11: memref<1x8x128xf32, #tpu.memory_space<vmem>>, %arg12: memref<128x128xf32, #tpu.memory_space<vmem>>, %arg13: memref<8x128xf32, #tpu.memory_space<vmem>>) attributes {dimension_semantics = [#tpu.dimension_semantics<parallel>, #tpu.dimension_semantics<arbitrary>], iteration_bounds = array<i64: 1, 1>, scalar_prefetch = 0 : i64, scratch_operands = 2 : i64, tpu.core_type = #tpu.core_type<tc>, window_params = [{transform_indices = @transform_0, window_bounds = array<i64: 1, 64, 16>}, {transform_indices = @transform_1, window_bounds = array<i64: 1, 64, 16>}, {pipeline_mode = #tpu.pipeline_mode<synchronous>, transform_indices = @transform_2, window_bounds = array<i64: 16, 128>}, {pipeline_mode = #tpu.pipeline_mode<synchronous>, transform_indices = @transform_3, window_bounds = array<i64: 128, 128>}, {pipeline_mode = #tpu.pipeline_mode<synchronous>, transform_indices = @transform_4, window_bounds = array<i64: 1, 128>}, {pipeline_mode = #tpu.pipeline_mode<synchronous>, transform_indices = @transform_5, window_bounds = array<i64: 128, 128>}, {pipeline_mode = #tpu.pipeline_mode<synchronous>, transform_indices = @transform_6, window_bounds = array<i64: 1, 128>}, {transform_indices = @transform_7, window_bounds = array<i64: 1, 8, 128>}, {transform_indices = @transform_8, window_bounds = array<i64: 1, 8, 128>}, {transform_indices = @transform_9, window_bounds = array<i64: 1, 8, 128>}]} {
    %c0_i32 = arith.constant 0 : i32
    %0 = arith.cmpi eq, %arg1, %c0_i32 : i32
    %1 = arith.extui %0 : i1 to i32
    %c0_i32_0 = arith.constant 0 : i32
    %2 = arith.cmpi ne, %1, %c0_i32_0 : i32
    scf.if %2 {
      %c0_22 = arith.constant 0 : index
      %c0_23 = arith.constant 0 : index
      %c0_24 = arith.constant 0 : index
      %37 = vector.load %arg9[%c0_22, %c0_23, %c0_24] : memref<1x8x128xf32, #tpu.memory_space<vmem>>, vector<1x8x128xf32>
      %38 = vector.shape_cast %37 : vector<1x8x128xf32> to vector<8x128xf32>
      %c0_25 = arith.constant 0 : index
      %c0_26 = arith.constant 0 : index
      %39 = vector.load %arg13[%c0_25, %c0_26] : memref<8x128xf32, #tpu.memory_space<vmem>>, vector<8x128xf32>
      tpu.vector_store %arg13[%c0_25, %c0_26], %38 {strides = array<i32>} : memref<8x128xf32, #tpu.memory_space<vmem>>, vector<8x128xf32>,
      %c0_27 = arith.constant 0 : index
      %c0_28 = arith.constant 0 : index
      %c0_29 = arith.constant 0 : index
      %40 = vector.load %arg2[%c0_27, %c0_28, %c0_29] : memref<1x64x16xf32, #tpu.memory_space<vmem>>, vector<1x64x16xf32>
      %41 = vector.shape_cast %40 : vector<1x64x16xf32> to vector<64x16xf32>
      %c0_30 = arith.constant 0 : index
      %c0_31 = arith.constant 0 : index
      %42 = vector.load %arg4[%c0_30, %c0_31] : memref<16x128xf32, #tpu.memory_space<vmem>>, vector<16x128xf32>
      %cst = arith.constant dense<0.000000e+00> : vector<64x128xf32>
      %43 = tpu.matmul %41, %42, %cst {dimension_numbers = #tpu.dot_dimension_numbers<[1], [0], [0], [1], [0, 0, 1, 1], [], []>} : vector<64x16xf32>, vector<16x128xf32>, vector<64x128xf32> -> vector<64x128xf32>
      %c0_32 = arith.constant 0 : index
      %c0_33 = arith.constant 0 : index
      %44 = vector.load %arg6[%c0_32, %c0_33] : memref<1x128xf32, #tpu.memory_space<vmem>>, vector<1x128xf32>
      %45 = vector.broadcast %44 : vector<1x128xf32> to vector<64x128xf32>
      %46 = arith.addf %43, %45 : vector<64x128xf32>
      %c0_34 = arith.constant 0 : index
      %c0_35 = arith.constant 0 : index
      %47 = vector.load %arg12[%c0_34, %c0_35] : memref<128x128xf32, #tpu.memory_space<vmem>>, vector<64x128xf32>
      tpu.vector_store %arg12[%c0_34, %c0_35], %46 {strides = array<i32>} : memref<128x128xf32, #tpu.memory_space<vmem>>, vector<64x128xf32>,
    } else {
    }
    %c0 = arith.constant 0 : index
    %c0_1 = arith.constant 0 : index
    %3 = vector.load %arg5[%c0, %c0_1] : memref<128x128xf32, #tpu.memory_space<vmem>>, vector<128x128xf32>
    %c0_2 = arith.constant 0 : index
    %c0_3 = arith.constant 0 : index
    %4 = vector.load %arg4[%c0_2, %c0_3] : memref<16x128xf32, #tpu.memory_space<vmem>>, vector<16x128xf32>
    %c0_4 = arith.constant 0 : index
    %c0_5 = arith.constant 0 : index
    %5 = vector.load %arg6[%c0_4, %c0_5] : memref<1x128xf32, #tpu.memory_space<vmem>>, vector<1x128xf32>
    %6 = vector.shape_cast %5 : vector<1x128xf32> to vector<1x128xf32>
    %7 = vector.broadcast %6 : vector<1x128xf32> to vector<8x128xf32>
    %c2_i32 = arith.constant 2 : i32
    %c0_i32_6 = arith.constant 0 : i32
    %8 = arith.cmpi eq, %c2_i32, %c0_i32_6 : i32
    %c1_i32 = arith.constant 1 : i32
    %9 = arith.select %8, %c1_i32, %c2_i32 : i32
    %10 = arith.remsi %arg1, %9 : i32
    %c0_i32_7 = arith.constant 0 : i32
    %11 = arith.cmpi ne, %10, %c0_i32_7 : i32
    %c0_i32_8 = arith.constant 0 : i32
    %12 = arith.cmpi slt, %10, %c0_i32_8 : i32
    %c0_i32_9 = arith.constant 0 : i32
    %13 = arith.cmpi slt, %9, %c0_i32_9 : i32
    %14 = arith.xori %12, %13 : i1
    %15 = arith.andi %14, %11 : i1
    %16 = arith.addi %10, %9 : i32
    %17 = arith.select %15, %16, %10 : i32
    %c64_i32 = arith.constant 64 : i32
    %18 = arith.muli %17, %c64_i32 : i32
    %c1_i32_10 = arith.constant 1 : i32
    %19 = arith.addi %arg1, %c1_i32_10 : i32
    %c2_i32_11 = arith.constant 2 : i32
    %c0_i32_12 = arith.constant 0 : i32
    %20 = arith.cmpi eq, %c2_i32_11, %c0_i32_12 : i32
    %c1_i32_13 = arith.constant 1 : i32
    %21 = arith.select %20, %c1_i32_13, %c2_i32_11 : i32
    %22 = arith.remsi %19, %21 : i32
    %c0_i32_14 = arith.constant 0 : i32
    %23 = arith.cmpi ne, %22, %c0_i32_14 : i32
    %c0_i32_15 = arith.constant 0 : i32
    %24 = arith.cmpi slt, %22, %c0_i32_15 : i32
    %c0_i32_16 = arith.constant 0 : i32
    %25 = arith.cmpi slt, %21, %c0_i32_16 : i32
    %26 = arith.xori %24, %25 : i1
    %27 = arith.andi %26, %23 : i1
    %28 = arith.addi %22, %21 : i32
    %29 = arith.select %27, %28, %22 : i32
    %c64_i32_17 = arith.constant 64 : i32
    %30 = arith.muli %29, %c64_i32_17 : i32
    %c0_i32_18 = arith.constant 0 : i32
    %31 = arith.cmpi slt, %arg1, %c0_i32_18 : i32
    %32 = arith.extui %31 : i1 to i32
    %c0_i32_19 = arith.constant 0 : i32
    %33 = arith.cmpi ne, %32, %c0_i32_19 : i32
    scf.if %33 {
      %c0_22 = arith.constant 0 : index
      %c0_23 = arith.constant 0 : index
      %37 = vector.load %arg13[%c0_22, %c0_23] : memref<8x128xf32, #tpu.memory_space<vmem>>, vector<8x128xf32>
      %c0_i32_24 = arith.constant 0 : i32
      %c8_i32 = arith.constant 8 : i32
      %38 = arith.muli %c0_i32_24, %c8_i32 : i32
      %39 = arith.addi %18, %38 : i32
      %40 = tpu.assume_multiple %39, 8 : i32
      %41 = arith.index_cast %40 : i32 to index
      %c0_25 = arith.constant 0 : index
      %42 = vector.load %arg12[%41, %c0_25] : memref<128x128xf32, #tpu.memory_space<vmem>>, vector<8x128xf32>
      %cst = arith.constant dense<0.000000e+00> : vector<8x128xf32>
      %43 = tpu.matmul %37, %3, %cst {dimension_numbers = #tpu.dot_dimension_numbers<[1], [0], [0], [1], [0, 0, 1, 1], [], []>} : vector<8x128xf32>, vector<128x128xf32>, vector<8x128xf32> -> vector<8x128xf32>
      %44 = arith.addf %42, %43 : vector<8x128xf32>
      %45 = math.tanh %44 : vector<8x128xf32>
      %46 = tpu.assume_multiple %38, 8 : i32
      %c0_26 = arith.constant 0 : index
      %47 = arith.index_cast %46 : i32 to index
      %c0_27 = arith.constant 0 : index
      %48 = vector.load %arg3[%c0_26, %47, %c0_27] : memref<1x64x16xf32, #tpu.memory_space<vmem>>, vector<1x8x16xf32>
      %49 = vector.shape_cast %48 : vector<1x8x16xf32> to vector<8x16xf32>
      %cst_28 = arith.constant dense<0.000000e+00> : vector<8x128xf32>
      %50 = tpu.matmul %49, %4, %cst_28 {dimension_numbers = #tpu.dot_dimension_numbers<[1], [0], [0], [1], [0, 0, 1, 1], [], []>} : vector<8x16xf32>, vector<16x128xf32>, vector<8x128xf32> -> vector<8x128xf32>
      %51 = arith.addf %50, %7 : vector<8x128xf32>
      %52 = arith.addi %30, %38 : i32
      %53 = tpu.assume_multiple %52, 8 : i32
      %54 = arith.index_cast %53 : i32 to index
      %c0_29 = arith.constant 0 : index
      %55 = vector.load %arg12[%54, %c0_29] : memref<128x128xf32, #tpu.memory_space<vmem>>, vector<8x128xf32>
      tpu.vector_store %arg12[%54, %c0_29], %51 {strides = array<i32>} : memref<128x128xf32, #tpu.memory_space<vmem>>, vector<8x128xf32>,
      %c1_i32_30 = arith.constant 1 : i32
      %c8_i32_31 = arith.constant 8 : i32
      %56 = arith.muli %c1_i32_30, %c8_i32_31 : i32
      %57 = arith.addi %18, %56 : i32
      %58 = tpu.assume_multiple %57, 8 : i32
      %59 = arith.index_cast %58 : i32 to index
      %c0_32 = arith.constant 0 : index
      %60 = vector.load %arg12[%59, %c0_32] : memref<128x128xf32, #tpu.memory_space<vmem>>, vector<8x128xf32>
      %cst_33 = arith.constant dense<0.000000e+00> : vector<8x128xf32>
      %61 = tpu.matmul %45, %3, %cst_33 {dimension_numbers = #tpu.dot_dimension_numbers<[1], [0], [0], [1], [0, 0, 1, 1], [], []>} : vector<8x128xf32>, vector<128x128xf32>, vector<8x128xf32> -> vector<8x128xf32>
      %62 = arith.addf %60, %61 : vector<8x128xf32>
      %63 = math.tanh %62 : vector<8x128xf32>
      %64 = tpu.assume_multiple %56, 8 : i32
      %c0_34 = arith.constant 0 : index
      %65 = arith.index_cast %64 : i32 to index
      %c0_35 = arith.constant 0 : index
      %66 = vector.load %arg3[%c0_34, %65, %c0_35] : memref<1x64x16xf32, #tpu.memory_space<vmem>>, vector<1x8x16xf32>
      %67 = vector.shape_cast %66 : vector<1x8x16xf32> to vector<8x16xf32>
      %cst_36 = arith.constant dense<0.000000e+00> : vector<8x128xf32>
      %68 = tpu.matmul %67, %4, %cst_36 {dimension_numbers = #tpu.dot_dimension_numbers<[1], [0], [0], [1], [0, 0, 1, 1], [], []>} : vector<8x16xf32>, vector<16x128xf32>, vector<8x128xf32> -> vector<8x128xf32>
      %69 = arith.addf %68, %7 : vector<8x128xf32>
      %70 = arith.addi %30, %56 : i32
      %71 = tpu.assume_multiple %70, 8 : i32
      %72 = arith.index_cast %71 : i32 to index
      %c0_37 = arith.constant 0 : index
      %73 = vector.load %arg12[%72, %c0_37] : memref<128x128xf32, #tpu.memory_space<vmem>>, vector<8x128xf32>
      tpu.vector_store %arg12[%72, %c0_37], %69 {strides = array<i32>} : memref<128x128xf32, #tpu.memory_space<vmem>>, vector<8x128xf32>,
      %c2_i32_38 = arith.constant 2 : i32
      %c8_i32_39 = arith.constant 8 : i32
      %74 = arith.muli %c2_i32_38, %c8_i32_39 : i32
      %75 = arith.addi %18, %74 : i32
      %76 = tpu.assume_multiple %75, 8 : i32
      %77 = arith.index_cast %76 : i32 to index
      %c0_40 = arith.constant 0 : index
      %78 = vector.load %arg12[%77, %c0_40] : memref<128x128xf32, #tpu.memory_space<vmem>>, vector<8x128xf32>
      %cst_41 = arith.constant dense<0.000000e+00> : vector<8x128xf32>
      %79 = tpu.matmul %63, %3, %cst_41 {dimension_numbers = #tpu.dot_dimension_numbers<[1], [0], [0], [1], [0, 0, 1, 1], [], []>} : vector<8x128xf32>, vector<128x128xf32>, vector<8x128xf32> -> vector<8x128xf32>
      %80 = arith.addf %78, %79 : vector<8x128xf32>
      %81 = math.tanh %80 : vector<8x128xf32>
      %82 = tpu.assume_multiple %74, 8 : i32
      %c0_42 = arith.constant 0 : index
      %83 = arith.index_cast %82 : i32 to index
      %c0_43 = arith.constant 0 : index
      %84 = vector.load %arg3[%c0_42, %83, %c0_43] : memref<1x64x16xf32, #tpu.memory_space<vmem>>, vector<1x8x16xf32>
      %85 = vector.shape_cast %84 : vector<1x8x16xf32> to vector<8x16xf32>
      %cst_44 = arith.constant dense<0.000000e+00> : vector<8x128xf32>
      %86 = tpu.matmul %85, %4, %cst_44 {dimension_numbers = #tpu.dot_dimension_numbers<[1], [0], [0], [1], [0, 0, 1, 1], [], []>} : vector<8x16xf32>, vector<16x128xf32>, vector<8x128xf32> -> vector<8x128xf32>
      %87 = arith.addf %86, %7 : vector<8x128xf32>
      %88 = arith.addi %30, %74 : i32
      %89 = tpu.assume_multiple %88, 8 : i32
      %90 = arith.index_cast %89 : i32 to index
      %c0_45 = arith.constant 0 : index
      %91 = vector.load %arg12[%90, %c0_45] : memref<128x128xf32, #tpu.memory_space<vmem>>, vector<8x128xf32>
      tpu.vector_store %arg12[%90, %c0_45], %87 {strides = array<i32>} : memref<128x128xf32, #tpu.memory_space<vmem>>, vector<8x128xf32>,
      %c3_i32 = arith.constant 3 : i32
      %c8_i32_46 = arith.constant 8 : i32
      %92 = arith.muli %c3_i32, %c8_i32_46 : i32
      %93 = arith.addi %18, %92 : i32
      %94 = tpu.assume_multiple %93, 8 : i32
      %95 = arith.index_cast %94 : i32 to index
      %c0_47 = arith.constant 0 : index
      %96 = vector.load %arg12[%95, %c0_47] : memref<128x128xf32, #tpu.memory_space<vmem>>, vector<8x128xf32>
      %cst_48 = arith.constant dense<0.000000e+00> : vector<8x128xf32>
      %97 = tpu.matmul %81, %3, %cst_48 {dimension_numbers = #tpu.dot_dimension_numbers<[1], [0], [0], [1], [0, 0, 1, 1], [], []>} : vector<8x128xf32>, vector<128x128xf32>, vector<8x128xf32> -> vector<8x128xf32>
      %98 = arith.addf %96, %97 : vector<8x128xf32>
      %99 = math.tanh %98 : vector<8x128xf32>
      %100 = tpu.assume_multiple %92, 8 : i32
      %c0_49 = arith.constant 0 : index
      %101 = arith.index_cast %100 : i32 to index
      %c0_50 = arith.constant 0 : index
      %102 = vector.load %arg3[%c0_49, %101, %c0_50] : memref<1x64x16xf32, #tpu.memory_space<vmem>>, vector<1x8x16xf32>
      %103 = vector.shape_cast %102 : vector<1x8x16xf32> to vector<8x16xf32>
      %cst_51 = arith.constant dense<0.000000e+00> : vector<8x128xf32>
      %104 = tpu.matmul %103, %4, %cst_51 {dimension_numbers = #tpu.dot_dimension_numbers<[1], [0], [0], [1], [0, 0, 1, 1], [], []>} : vector<8x16xf32>, vector<16x128xf32>, vector<8x128xf32> -> vector<8x128xf32>
      %105 = arith.addf %104, %7 : vector<8x128xf32>
      %106 = arith.addi %30, %92 : i32
      %107 = tpu.assume_multiple %106, 8 : i32
      %108 = arith.index_cast %107 : i32 to index
      %c0_52 = arith.constant 0 : index
      %109 = vector.load %arg12[%108, %c0_52] : memref<128x128xf32, #tpu.memory_space<vmem>>, vector<8x128xf32>
      tpu.vector_store %arg12[%108, %c0_52], %105 {strides = array<i32>} : memref<128x128xf32, #tpu.memory_space<vmem>>, vector<8x128xf32>,
      %c4_i32 = arith.constant 4 : i32
      %c8_i32_53 = arith.constant 8 : i32
      %110 = arith.muli %c4_i32, %c8_i32_53 : i32
      %111 = arith.addi %18, %110 : i32
      %112 = tpu.assume_multiple %111, 8 : i32
      %113 = arith.index_cast %112 : i32 to index
      %c0_54 = arith.constant 0 : index
      %114 = vector.load %arg12[%113, %c0_54] : memref<128x128xf32, #tpu.memory_space<vmem>>, vector<8x128xf32>
      %cst_55 = arith.constant dense<0.000000e+00> : vector<8x128xf32>
      %115 = tpu.matmul %99, %3, %cst_55 {dimension_numbers = #tpu.dot_dimension_numbers<[1], [0], [0], [1], [0, 0, 1, 1], [], []>} : vector<8x128xf32>, vector<128x128xf32>, vector<8x128xf32> -> vector<8x128xf32>
      %116 = arith.addf %114, %115 : vector<8x128xf32>
      %117 = math.tanh %116 : vector<8x128xf32>
      %118 = tpu.assume_multiple %110, 8 : i32
      %c0_56 = arith.constant 0 : index
      %119 = arith.index_cast %118 : i32 to index
      %c0_57 = arith.constant 0 : index
      %120 = vector.load %arg3[%c0_56, %119, %c0_57] : memref<1x64x16xf32, #tpu.memory_space<vmem>>, vector<1x8x16xf32>
      %121 = vector.shape_cast %120 : vector<1x8x16xf32> to vector<8x16xf32>
      %cst_58 = arith.constant dense<0.000000e+00> : vector<8x128xf32>
      %122 = tpu.matmul %121, %4, %cst_58 {dimension_numbers = #tpu.dot_dimension_numbers<[1], [0], [0], [1], [0, 0, 1, 1], [], []>} : vector<8x16xf32>, vector<16x128xf32>, vector<8x128xf32> -> vector<8x128xf32>
      %123 = arith.addf %122, %7 : vector<8x128xf32>
      %124 = arith.addi %30, %110 : i32
      %125 = tpu.assume_multiple %124, 8 : i32
      %126 = arith.index_cast %125 : i32 to index
      %c0_59 = arith.constant 0 : index
      %127 = vector.load %arg12[%126, %c0_59] : memref<128x128xf32, #tpu.memory_space<vmem>>, vector<8x128xf32>
      tpu.vector_store %arg12[%126, %c0_59], %123 {strides = array<i32>} : memref<128x128xf32, #tpu.memory_space<vmem>>, vector<8x128xf32>,
      %c5_i32 = arith.constant 5 : i32
      %c8_i32_60 = arith.constant 8 : i32
      %128 = arith.muli %c5_i32, %c8_i32_60 : i32
      %129 = arith.addi %18, %128 : i32
      %130 = tpu.assume_multiple %129, 8 : i32
      %131 = arith.index_cast %130 : i32 to index
      %c0_61 = arith.constant 0 : index
      %132 = vector.load %arg12[%131, %c0_61] : memref<128x128xf32, #tpu.memory_space<vmem>>, vector<8x128xf32>
      %cst_62 = arith.constant dense<0.000000e+00> : vector<8x128xf32>
      %133 = tpu.matmul %117, %3, %cst_62 {dimension_numbers = #tpu.dot_dimension_numbers<[1], [0], [0], [1], [0, 0, 1, 1], [], []>} : vector<8x128xf32>, vector<128x128xf32>, vector<8x128xf32> -> vector<8x128xf32>
      %134 = arith.addf %132, %133 : vector<8x128xf32>
      %135 = math.tanh %134 : vector<8x128xf32>
      %136 = tpu.assume_multiple %128, 8 : i32
      %c0_63 = arith.constant 0 : index
      %137 = arith.index_cast %136 : i32 to index
      %c0_64 = arith.constant 0 : index
      %138 = vector.load %arg3[%c0_63, %137, %c0_64] : memref<1x64x16xf32, #tpu.memory_space<vmem>>, vector<1x8x16xf32>
      %139 = vector.shape_cast %138 : vector<1x8x16xf32> to vector<8x16xf32>
      %cst_65 = arith.constant dense<0.000000e+00> : vector<8x128xf32>
      %140 = tpu.matmul %139, %4, %cst_65 {dimension_numbers = #tpu.dot_dimension_numbers<[1], [0], [0], [1], [0, 0, 1, 1], [], []>} : vector<8x16xf32>, vector<16x128xf32>, vector<8x128xf32> -> vector<8x128xf32>
      %141 = arith.addf %140, %7 : vector<8x128xf32>
      %142 = arith.addi %30, %128 : i32
      %143 = tpu.assume_multiple %142, 8 : i32
      %144 = arith.index_cast %143 : i32 to index
      %c0_66 = arith.constant 0 : index
      %145 = vector.load %arg12[%144, %c0_66] : memref<128x128xf32, #tpu.memory_space<vmem>>, vector<8x128xf32>
      tpu.vector_store %arg12[%144, %c0_66], %141 {strides = array<i32>} : memref<128x128xf32, #tpu.memory_space<vmem>>, vector<8x128xf32>,
      %c6_i32 = arith.constant 6 : i32
      %c8_i32_67 = arith.constant 8 : i32
      %146 = arith.muli %c6_i32, %c8_i32_67 : i32
      %147 = arith.addi %18, %146 : i32
      %148 = tpu.assume_multiple %147, 8 : i32
      %149 = arith.index_cast %148 : i32 to index
      %c0_68 = arith.constant 0 : index
      %150 = vector.load %arg12[%149, %c0_68] : memref<128x128xf32, #tpu.memory_space<vmem>>, vector<8x128xf32>
      %cst_69 = arith.constant dense<0.000000e+00> : vector<8x128xf32>
      %151 = tpu.matmul %135, %3, %cst_69 {dimension_numbers = #tpu.dot_dimension_numbers<[1], [0], [0], [1], [0, 0, 1, 1], [], []>} : vector<8x128xf32>, vector<128x128xf32>, vector<8x128xf32> -> vector<8x128xf32>
      %152 = arith.addf %150, %151 : vector<8x128xf32>
      %153 = math.tanh %152 : vector<8x128xf32>
      %154 = tpu.assume_multiple %146, 8 : i32
      %c0_70 = arith.constant 0 : index
      %155 = arith.index_cast %154 : i32 to index
      %c0_71 = arith.constant 0 : index
      %156 = vector.load %arg3[%c0_70, %155, %c0_71] : memref<1x64x16xf32, #tpu.memory_space<vmem>>, vector<1x8x16xf32>
      %157 = vector.shape_cast %156 : vector<1x8x16xf32> to vector<8x16xf32>
      %cst_72 = arith.constant dense<0.000000e+00> : vector<8x128xf32>
      %158 = tpu.matmul %157, %4, %cst_72 {dimension_numbers = #tpu.dot_dimension_numbers<[1], [0], [0], [1], [0, 0, 1, 1], [], []>} : vector<8x16xf32>, vector<16x128xf32>, vector<8x128xf32> -> vector<8x128xf32>
      %159 = arith.addf %158, %7 : vector<8x128xf32>
      %160 = arith.addi %30, %146 : i32
      %161 = tpu.assume_multiple %160, 8 : i32
      %162 = arith.index_cast %161 : i32 to index
      %c0_73 = arith.constant 0 : index
      %163 = vector.load %arg12[%162, %c0_73] : memref<128x128xf32, #tpu.memory_space<vmem>>, vector<8x128xf32>
      tpu.vector_store %arg12[%162, %c0_73], %159 {strides = array<i32>} : memref<128x128xf32, #tpu.memory_space<vmem>>, vector<8x128xf32>,
      %c7_i32 = arith.constant 7 : i32
      %c8_i32_74 = arith.constant 8 : i32
      %164 = arith.muli %c7_i32, %c8_i32_74 : i32
      %165 = arith.addi %18, %164 : i32
      %166 = tpu.assume_multiple %165, 8 : i32
      %167 = arith.index_cast %166 : i32 to index
      %c0_75 = arith.constant 0 : index
      %168 = vector.load %arg12[%167, %c0_75] : memref<128x128xf32, #tpu.memory_space<vmem>>, vector<8x128xf32>
      %cst_76 = arith.constant dense<0.000000e+00> : vector<8x128xf32>
      %169 = tpu.matmul %153, %3, %cst_76 {dimension_numbers = #tpu.dot_dimension_numbers<[1], [0], [0], [1], [0, 0, 1, 1], [], []>} : vector<8x128xf32>, vector<128x128xf32>, vector<8x128xf32> -> vector<8x128xf32>
      %170 = arith.addf %168, %169 : vector<8x128xf32>
      %171 = math.tanh %170 : vector<8x128xf32>
      %172 = tpu.assume_multiple %164, 8 : i32
      %c0_77 = arith.constant 0 : index
      %173 = arith.index_cast %172 : i32 to index
      %c0_78 = arith.constant 0 : index
      %174 = vector.load %arg3[%c0_77, %173, %c0_78] : memref<1x64x16xf32, #tpu.memory_space<vmem>>, vector<1x8x16xf32>
      %175 = vector.shape_cast %174 : vector<1x8x16xf32> to vector<8x16xf32>
      %cst_79 = arith.constant dense<0.000000e+00> : vector<8x128xf32>
      %176 = tpu.matmul %175, %4, %cst_79 {dimension_numbers = #tpu.dot_dimension_numbers<[1], [0], [0], [1], [0, 0, 1, 1], [], []>} : vector<8x16xf32>, vector<16x128xf32>, vector<8x128xf32> -> vector<8x128xf32>
      %177 = arith.addf %176, %7 : vector<8x128xf32>
      %178 = arith.addi %30, %164 : i32
      %179 = tpu.assume_multiple %178, 8 : i32
      %180 = arith.index_cast %179 : i32 to index
      %c0_80 = arith.constant 0 : index
      %181 = vector.load %arg12[%180, %c0_80] : memref<128x128xf32, #tpu.memory_space<vmem>>, vector<8x128xf32>
      tpu.vector_store %arg12[%180, %c0_80], %177 {strides = array<i32>} : memref<128x128xf32, #tpu.memory_space<vmem>>, vector<8x128xf32>,
      %c8_i32_81 = arith.constant 8 : i32
      %c0_82 = arith.constant 0 : index
      %c0_83 = arith.constant 0 : index
      %182 = vector.load %arg13[%c0_82, %c0_83] : memref<8x128xf32, #tpu.memory_space<vmem>>, vector<8x128xf32>
      tpu.vector_store %arg13[%c0_82, %c0_83], %171 {strides = array<i32>} : memref<8x128xf32, #tpu.memory_space<vmem>>, vector<8x128xf32>,
    } else {
    }
    %c0_i32_20 = arith.constant 0 : i32
    %34 = arith.cmpi eq, %arg1, %c0_i32_20 : i32
    %35 = arith.extui %34 : i1 to i32
    %c0_i32_21 = arith.constant 0 : i32
    %36 = arith.cmpi ne, %35, %c0_i32_21 : i32
    scf.if %36 {
      %c0_22 = arith.constant 0 : index
      %c0_23 = arith.constant 0 : index
      %37 = vector.load %arg13[%c0_22, %c0_23] : memref<8x128xf32, #tpu.memory_space<vmem>>, vector<8x128xf32>
      %c0_i32_24 = arith.constant 0 : i32
      %c8_i32 = arith.constant 8 : i32
      %38 = arith.muli %c0_i32_24, %c8_i32 : i32
      %39 = arith.addi %18, %38 : i32
      %40 = tpu.assume_multiple %39, 8 : i32
      %41 = arith.index_cast %40 : i32 to index
      %c0_25 = arith.constant 0 : index
      %42 = vector.load %arg12[%41, %c0_25] : memref<128x128xf32, #tpu.memory_space<vmem>>, vector<8x128xf32>
      %cst = arith.constant dense<0.000000e+00> : vector<8x128xf32>
      %43 = tpu.matmul %37, %3, %cst {dimension_numbers = #tpu.dot_dimension_numbers<[1], [0], [0], [1], [0, 0, 1, 1], [], []>} : vector<8x128xf32>, vector<128x128xf32>, vector<8x128xf32> -> vector<8x128xf32>
      %44 = arith.addf %42, %43 : vector<8x128xf32>
      %45 = math.tanh %44 : vector<8x128xf32>
      %c1_i32_26 = arith.constant 1 : i32
      %c8_i32_27 = arith.constant 8 : i32
      %46 = arith.muli %c1_i32_26, %c8_i32_27 : i32
      %47 = arith.addi %18, %46 : i32
      %48 = tpu.assume_multiple %47, 8 : i32
      %49 = arith.index_cast %48 : i32 to index
      %c0_28 = arith.constant 0 : index
      %50 = vector.load %arg12[%49, %c0_28] : memref<128x128xf32, #tpu.memory_space<vmem>>, vector<8x128xf32>
      %cst_29 = arith.constant dense<0.000000e+00> : vector<8x128xf32>
      %51 = tpu.matmul %45, %3, %cst_29 {dimension_numbers = #tpu.dot_dimension_numbers<[1], [0], [0], [1], [0, 0, 1, 1], [], []>} : vector<8x128xf32>, vector<128x128xf32>, vector<8x128xf32> -> vector<8x128xf32>
      %52 = arith.addf %50, %51 : vector<8x128xf32>
      %53 = math.tanh %52 : vector<8x128xf32>
      %c2_i32_30 = arith.constant 2 : i32
      %c8_i32_31 = arith.constant 8 : i32
      %54 = arith.muli %c2_i32_30, %c8_i32_31 : i32
      %55 = arith.addi %18, %54 : i32
      %56 = tpu.assume_multiple %55, 8 : i32
      %57 = arith.index_cast %56 : i32 to index
      %c0_32 = arith.constant 0 : index
      %58 = vector.load %arg12[%57, %c0_32] : memref<128x128xf32, #tpu.memory_space<vmem>>, vector<8x128xf32>
      %cst_33 = arith.constant dense<0.000000e+00> : vector<8x128xf32>
      %59 = tpu.matmul %53, %3, %cst_33 {dimension_numbers = #tpu.dot_dimension_numbers<[1], [0], [0], [1], [0, 0, 1, 1], [], []>} : vector<8x128xf32>, vector<128x128xf32>, vector<8x128xf32> -> vector<8x128xf32>
      %60 = arith.addf %58, %59 : vector<8x128xf32>
      %61 = math.tanh %60 : vector<8x128xf32>
      %c3_i32 = arith.constant 3 : i32
      %c8_i32_34 = arith.constant 8 : i32
      %62 = arith.muli %c3_i32, %c8_i32_34 : i32
      %63 = arith.addi %18, %62 : i32
      %64 = tpu.assume_multiple %63, 8 : i32
      %65 = arith.index_cast %64 : i32 to index
      %c0_35 = arith.constant 0 : index
      %66 = vector.load %arg12[%65, %c0_35] : memref<128x128xf32, #tpu.memory_space<vmem>>, vector<8x128xf32>
      %cst_36 = arith.constant dense<0.000000e+00> : vector<8x128xf32>
      %67 = tpu.matmul %61, %3, %cst_36 {dimension_numbers = #tpu.dot_dimension_numbers<[1], [0], [0], [1], [0, 0, 1, 1], [], []>} : vector<8x128xf32>, vector<128x128xf32>, vector<8x128xf32> -> vector<8x128xf32>
      %68 = arith.addf %66, %67 : vector<8x128xf32>
      %69 = math.tanh %68 : vector<8x128xf32>
      %c4_i32 = arith.constant 4 : i32
      %c8_i32_37 = arith.constant 8 : i32
      %70 = arith.muli %c4_i32, %c8_i32_37 : i32
      %71 = arith.addi %18, %70 : i32
      %72 = tpu.assume_multiple %71, 8 : i32
      %73 = arith.index_cast %72 : i32 to index
      %c0_38 = arith.constant 0 : index
      %74 = vector.load %arg12[%73, %c0_38] : memref<128x128xf32, #tpu.memory_space<vmem>>, vector<8x128xf32>
      %cst_39 = arith.constant dense<0.000000e+00> : vector<8x128xf32>
      %75 = tpu.matmul %69, %3, %cst_39 {dimension_numbers = #tpu.dot_dimension_numbers<[1], [0], [0], [1], [0, 0, 1, 1], [], []>} : vector<8x128xf32>, vector<128x128xf32>, vector<8x128xf32> -> vector<8x128xf32>
      %76 = arith.addf %74, %75 : vector<8x128xf32>
      %77 = math.tanh %76 : vector<8x128xf32>
      %c5_i32 = arith.constant 5 : i32
      %c8_i32_40 = arith.constant 8 : i32
      %78 = arith.muli %c5_i32, %c8_i32_40 : i32
      %79 = arith.addi %18, %78 : i32
      %80 = tpu.assume_multiple %79, 8 : i32
      %81 = arith.index_cast %80 : i32 to index
      %c0_41 = arith.constant 0 : index
      %82 = vector.load %arg12[%81, %c0_41] : memref<128x128xf32, #tpu.memory_space<vmem>>, vector<8x128xf32>
      %cst_42 = arith.constant dense<0.000000e+00> : vector<8x128xf32>
      %83 = tpu.matmul %77, %3, %cst_42 {dimension_numbers = #tpu.dot_dimension_numbers<[1], [0], [0], [1], [0, 0, 1, 1], [], []>} : vector<8x128xf32>, vector<128x128xf32>, vector<8x128xf32> -> vector<8x128xf32>
      %84 = arith.addf %82, %83 : vector<8x128xf32>
      %85 = math.tanh %84 : vector<8x128xf32>
      %c6_i32 = arith.constant 6 : i32
      %c8_i32_43 = arith.constant 8 : i32
      %86 = arith.muli %c6_i32, %c8_i32_43 : i32
      %87 = arith.addi %18, %86 : i32
      %88 = tpu.assume_multiple %87, 8 : i32
      %89 = arith.index_cast %88 : i32 to index
      %c0_44 = arith.constant 0 : index
      %90 = vector.load %arg12[%89, %c0_44] : memref<128x128xf32, #tpu.memory_space<vmem>>, vector<8x128xf32>
      %cst_45 = arith.constant dense<0.000000e+00> : vector<8x128xf32>
      %91 = tpu.matmul %85, %3, %cst_45 {dimension_numbers = #tpu.dot_dimension_numbers<[1], [0], [0], [1], [0, 0, 1, 1], [], []>} : vector<8x128xf32>, vector<128x128xf32>, vector<8x128xf32> -> vector<8x128xf32>
      %92 = arith.addf %90, %91 : vector<8x128xf32>
      %93 = math.tanh %92 : vector<8x128xf32>
      %c7_i32 = arith.constant 7 : i32
      %c8_i32_46 = arith.constant 8 : i32
      %94 = arith.muli %c7_i32, %c8_i32_46 : i32
      %95 = arith.addi %18, %94 : i32
      %96 = tpu.assume_multiple %95, 8 : i32
      %97 = arith.index_cast %96 : i32 to index
      %c0_47 = arith.constant 0 : index
      %98 = vector.load %arg12[%97, %c0_47] : memref<128x128xf32, #tpu.memory_space<vmem>>, vector<8x128xf32>
      %cst_48 = arith.constant dense<0.000000e+00> : vector<8x128xf32>
      %99 = tpu.matmul %93, %3, %cst_48 {dimension_numbers = #tpu.dot_dimension_numbers<[1], [0], [0], [1], [0, 0, 1, 1], [], []>} : vector<8x128xf32>, vector<128x128xf32>, vector<8x128xf32> -> vector<8x128xf32>
      %100 = arith.addf %98, %99 : vector<8x128xf32>
      %101 = math.tanh %100 : vector<8x128xf32>
      %c8_i32_49 = arith.constant 8 : i32
      %c0_50 = arith.constant 0 : index
      %c0_51 = arith.constant 0 : index
      %102 = vector.load %arg13[%c0_50, %c0_51] : memref<8x128xf32, #tpu.memory_space<vmem>>, vector<8x128xf32>
      tpu.vector_store %arg13[%c0_50, %c0_51], %101 {strides = array<i32>} : memref<8x128xf32, #tpu.memory_space<vmem>>, vector<8x128xf32>,
      %c0_52 = arith.constant 0 : index
      %c0_53 = arith.constant 0 : index
      %103 = vector.load %arg13[%c0_52, %c0_53] : memref<8x128xf32, #tpu.memory_space<vmem>>, vector<8x128xf32>
      %c0_54 = arith.constant 0 : index
      %c0_55 = arith.constant 0 : index
      %c0_56 = arith.constant 0 : index
      %104 = vector.load %arg11[%c0_54, %c0_55, %c0_56] : memref<1x8x128xf32, #tpu.memory_space<vmem>>, vector<1x8x128xf32>
      %105 = vector.shape_cast %104 : vector<1x8x128xf32> to vector<8x128xf32>
      %106 = vector.shape_cast %103 : vector<8x128xf32> to vector<1x8x128xf32>
      tpu.vector_store %arg11[%c0_54, %c0_55, %c0_56], %106 {strides = array<i32>} : memref<1x8x128xf32, #tpu.memory_space<vmem>>, vector<1x8x128xf32>,
      %c0_57 = arith.constant 0 : index
      %c0_58 = arith.constant 0 : index
      %107 = vector.load %arg7[%c0_57, %c0_58] : memref<128x128xf32, #tpu.memory_space<vmem>>, vector<128x128xf32>
      %cst_59 = arith.constant dense<0.000000e+00> : vector<8x128xf32>
      %108 = tpu.matmul %103, %107, %cst_59 {dimension_numbers = #tpu.dot_dimension_numbers<[1], [0], [0], [1], [0, 0, 1, 1], [], []>} : vector<8x128xf32>, vector<128x128xf32>, vector<8x128xf32> -> vector<8x128xf32>
      %c0_60 = arith.constant 0 : index
      %c0_61 = arith.constant 0 : index
      %109 = vector.load %arg8[%c0_60, %c0_61] : memref<1x128xf32, #tpu.memory_space<vmem>>, vector<1x128xf32>
      %110 = vector.broadcast %109 : vector<1x128xf32> to vector<8x128xf32>
      %111 = arith.addf %108, %110 : vector<8x128xf32>
      %cst_62 = arith.constant 0.000000e+00 : f32
      %112 = vector.broadcast %cst_62 : f32 to vector<8x128xf32>
      %113 = arith.maximumf %111, %112 : vector<8x128xf32>
      %cst_63 = arith.constant 5.000000e+00 : f32
      %114 = vector.broadcast %cst_63 : f32 to vector<8x128xf32>
      %115 = arith.minimumf %113, %114 : vector<8x128xf32>
      %c0_64 = arith.constant 0 : index
      %c0_65 = arith.constant 0 : index
      %c0_66 = arith.constant 0 : index
      %116 = vector.load %arg10[%c0_64, %c0_65, %c0_66] : memref<1x8x128xf32, #tpu.memory_space<vmem>>, vector<1x8x128xf32>
      %117 = vector.shape_cast %116 : vector<1x8x128xf32> to vector<8x128xf32>
      %118 = vector.shape_cast %115 : vector<8x128xf32> to vector<1x8x128xf32>
      tpu.vector_store %arg10[%c0_64, %c0_65, %c0_66], %118 {strides = array<i32>} : memref<1x8x128xf32, #tpu.memory_space<vmem>>, vector<1x8x128xf32>,
    } else {
    }
    return
  }
  func.func @transform_0(%arg0: i32, %arg1: i32) -> (i32, i32, i32) {
    %c0_i32 = arith.constant 0 : i32
    %c0_i32_0 = arith.constant 0 : i32
    %c0_i32_1 = arith.constant 0 : i32
    return %arg0, %c0_i32, %c0_i32_0 : i32, i32, i32
  }
  func.func @transform_1(%arg0: i32, %arg1: i32) -> (i32, i32, i32) {
    %c1_i32 = arith.constant 1 : i32
    %0 = arith.addi %arg1, %c1_i32 : i32
    %c0_i32 = arith.constant 0 : i32
    %1 = arith.minsi %0, %c0_i32 : i32
    %c0_i32_0 = arith.constant 0 : i32
    %c0_i32_1 = arith.constant 0 : i32
    return %arg0, %1, %c0_i32_0 : i32, i32, i32
  }
  func.func @transform_2(%arg0: i32, %arg1: i32) -> (i32, i32) {
    %c0_i32 = arith.constant 0 : i32
    %c0_i32_0 = arith.constant 0 : i32
    %c0_i32_1 = arith.constant 0 : i32
    return %c0_i32, %c0_i32_0 : i32, i32
  }
  func.func @transform_3(%arg0: i32, %arg1: i32) -> (i32, i32) {
    %c0_i32 = arith.constant 0 : i32
    %c0_i32_0 = arith.constant 0 : i32
    %c0_i32_1 = arith.constant 0 : i32
    return %c0_i32, %c0_i32_0 : i32, i32
  }
  func.func @transform_4(%arg0: i32, %arg1: i32) -> (i32, i32) {
    %c0_i32 = arith.constant 0 : i32
    %c0_i32_0 = arith.constant 0 : i32
    %c0_i32_1 = arith.constant 0 : i32
    return %c0_i32, %c0_i32_0 : i32, i32
  }
  func.func @transform_5(%arg0: i32, %arg1: i32) -> (i32, i32) {
    %c0_i32 = arith.constant 0 : i32
    %c0_i32_0 = arith.constant 0 : i32
    %c0_i32_1 = arith.constant 0 : i32
    return %c0_i32, %c0_i32_0 : i32, i32
  }
  func.func @transform_6(%arg0: i32, %arg1: i32) -> (i32, i32) {
    %c0_i32 = arith.constant 0 : i32
    %c0_i32_0 = arith.constant 0 : i32
    %c0_i32_1 = arith.constant 0 : i32
    return %c0_i32, %c0_i32_0 : i32, i32
  }
  func.func @transform_7(%arg0: i32, %arg1: i32) -> (i32, i32, i32) {
    %c0_i32 = arith.constant 0 : i32
    %c0_i32_0 = arith.constant 0 : i32
    %c0_i32_1 = arith.constant 0 : i32
    return %arg0, %c0_i32, %c0_i32_0 : i32, i32, i32
  }
  func.func @transform_8(%arg0: i32, %arg1: i32) -> (i32, i32, i32) {
    %c0_i32 = arith.constant 0 : i32
    %c0_i32_0 = arith.constant 0 : i32
    %c0_i32_1 = arith.constant 0 : i32
    return %arg0, %c0_i32, %c0_i32_0 : i32, i32, i32
  }
  func.func @transform_9(%arg0: i32, %arg1: i32) -> (i32, i32, i32) {
    %c0_i32 = arith.constant 0 : i32
    %c0_i32_0 = arith.constant 0 : i32
    %c0_i32_1 = arith.constant 0 : i32
    return %arg0, %c0_i32, %c0_i32_0 : i32, i32, i32
  }
}

</mosaic_0001>

<llo_original>
// kernel: tpu_custom_call.1
$region0: #{tpu_custom_call.1}
  #allocation0 [shape = 'u32[]', space=smem, size = 0x4, offset = 0x4, fixed_abs, tag = 'smem constant byte address 0x4 - core index']
  #allocation1 [shape = 'u32[144,128]{1,0:T(1,128)}', space=vmem, size = 0x12000, scoped, tag = 'internal scratch']
  #allocation2 [shape = 'f32[128,128]{1,0:T(8,128)}', space=vmem, size = 0x10000, scoped, tag = 'scratch operand']
  #allocation3 [shape = 'f32[8,128]{1,0:T(8,128)}', space=vmem, size = 0x1000, scoped, tag = 'scratch operand']
  %s0 = inlined_call_operand.vmem [shape: f32[1,64,16], index: 0, kind: input, shape index: {}]
  %s1 = inlined_call_operand.vmem [shape: f32[1,64,16], index: 1, kind: input, shape index: {}]
  %s2 = inlined_call_operand.vmem [shape: f32[16,128], index: 2, kind: input, shape index: {}]
  %s3 = inlined_call_operand.vmem [shape: f32[128,128], index: 3, kind: input, shape index: {}]
  %s4 = inlined_call_operand.vmem [shape: f32[1,128], index: 4, kind: input, shape index: {}]
  %s5 = inlined_call_operand.hbm [shape: f32[128,128], index: 5, kind: input, shape index: {}]
  %s6 = inlined_call_operand.vmem [shape: f32[1,128], index: 6, kind: input, shape index: {}]
  %s7 = inlined_call_operand.vmem [shape: f32[1,8,128], index: 7, kind: input, shape index: {}]
  %s8 = inlined_call_operand.hbm [shape: f32[1,8,128], index: 8, kind: output, shape index: {0}]
  %s9 = inlined_call_operand.hbm [shape: f32[1,8,128], index: 9, kind: output, shape index: {1}]
  %10 = xla_tuple %s8, %s9
  %s11 = sld [smem:[#allocation0]]
  $region66: #{tpu_custom_call.1} parent=0
    _
  %s13 = ssub.s32 1, %s11
  %s14 = scalar_select 0, %s13, %s11
  $region1: #{tpu_custom_call.1} parent=0
    #allocation4 [shape = 'u8[65536]{0}', space=vmem, size = 0x10000, scoped, tag = 'input window, operand 5, single buffered']
    #allocation5 [shape = 's32[1]{0}', space=sflag, size = 0x4, scoped, tag = 'scoped memory for tpu_custom_call.1']
    #allocation6 [shape = 's32[1]{0}', space=sflag, size = 0x4, scoped, tag = 'scoped memory for tpu_custom_call.1']
    #allocation7 [shape = 'u8[4096]{0}', space=vmem, size = 0x1000, scoped, tag = 'output window, operand 0, single buffered']
    #allocation8 [shape = 'u8[4096]{0}', space=vmem, size = 0x1000, scoped, tag = 'output window, operand 1, single buffered']
    #allocation9 [shape = 's32[1]{0}', space=sflag, size = 0x4, scoped, tag = 'scoped memory for tpu_custom_call.1']
    %15 = vsyncpa [#allocation5], 0
    %16 = vsyncpa [#allocation6], 0
    %17 = vsyncpa [#allocation9], 0
    // Predicated region
    $region2: #{tpu_custom_call.1} parent=1 // pred_check
      _
    $region3: #{tpu_custom_call.1} parent=1 // pred_check_branch
      %19 = sbr.rel (0) target = $region5
    $region4: #{tpu_custom_call.1} parent=1 // pred_region
      _
    $region5: #{tpu_custom_call.1} parent=1 // pred_fallthru
      _
    // Predicated region
    $region6: #{tpu_custom_call.1} parent=1 // pred_check
      _
    $region7: #{tpu_custom_call.1} parent=1 // pred_check_branch
      %21 = sbr.rel (0) target = $region9
    $region8: #{tpu_custom_call.1} parent=1 // pred_region
      %s22 = sadd.s32 0, 1
      %p23 = scmp.lt.s32.totalorder %s22, 0
      %s24 = scalar_select %p23, %s22, 0
      %s25 = smul.u32 8, %s24
      %p26 = scmp.lt.s32.totalorder %s25, 7
      %s27 = scalar_select %p26, %s25, 7
      %s28 = smul.addr %s27, 8
      %s29 = scalar_lea.vmem %s1, %s28
      %s30 = sadd.s32 0, 1
      %p31 = scmp.lt.s32.totalorder %s30, 0
      %s32 = scalar_select %p31, %s30, 0
      %s33 = smul.u32 8, %s32
    $region9: #{tpu_custom_call.1} parent=1 // pred_fallthru
      _
    // Predicated region
    $region10: #{tpu_custom_call.1} parent=1 // pred_check
      _
    $region11: #{tpu_custom_call.1} parent=1 // pred_check_branch
      %35 = sbr.rel (0) target = $region13
    $region12: #{tpu_custom_call.1} parent=1 // pred_region
      _
    $region13: #{tpu_custom_call.1} parent=1 // pred_fallthru
      _
    // Predicated region
    $region14: #{tpu_custom_call.1} parent=1 // pred_check
      _
    $region15: #{tpu_custom_call.1} parent=1 // pred_check_branch
      %37 = sbr.rel (0) target = $region17
    $region16: #{tpu_custom_call.1} parent=1 // pred_region
      _
    $region17: #{tpu_custom_call.1} parent=1 // pred_fallthru
      _
    // Predicated region
    $region18: #{tpu_custom_call.1} parent=1 // pred_check
      _
    $region19: #{tpu_custom_call.1} parent=1 // pred_check_branch
      %39 = sbr.rel (0) target = $region21
    $region20: #{tpu_custom_call.1} parent=1 // pred_region
      _
    $region21: #{tpu_custom_call.1} parent=1 // pred_fallthru
      _
    // Predicated region
    $region22: #{tpu_custom_call.1} parent=1 // pred_check
      _
    $region23: #{tpu_custom_call.1} parent=1 // pred_check_branch
      %41 = sbr.rel (0) target = $region25
    $region24: #{tpu_custom_call.1} parent=1 // pred_region
      %s43 = ssub.s32 2048, 2048
      %44 = vsyncadd [#allocation5], %s43
      %s45 = sshll.u32 [#allocation4], 4
      %s46 = int_to_ptr.vmem [resolvable:$true] %s45
      %51 = dma.hbm_to_vmem [thread:$0]  %s5, 2048, %s46, [#allocation5], 128, 128, 8
    $region25: #{tpu_custom_call.1} parent=1 // pred_fallthru
      _
    // Predicated region
    $region26: #{tpu_custom_call.1} parent=1 // pred_check
      _
    $region27: #{tpu_custom_call.1} parent=1 // pred_check_branch
      %53 = sbr.rel (0) target = $region29
    $region28: #{tpu_custom_call.1} parent=1 // pred_region
      _
    $region29: #{tpu_custom_call.1} parent=1 // pred_fallthru
      _
    // Predicated region
    $region30: #{tpu_custom_call.1} parent=1 // pred_check
      _
    $region31: #{tpu_custom_call.1} parent=1 // pred_check_branch
      %55 = sbr.rel (0) target = $region33
    $region32: #{tpu_custom_call.1} parent=1 // pred_region
      _
    $region33: #{tpu_custom_call.1} parent=1 // pred_fallthru
      _
    // Predicated region
    $region34: #{tpu_custom_call.1} parent=1 // pred_check
      _
    $region35: #{tpu_custom_call.1} parent=1 // pred_check_branch
      %57 = sbr.rel (0) target = $region37
    $region36: #{tpu_custom_call.1} parent=1 // pred_region
      %58 = dma.done [#allocation5], 2048
    $region37: #{tpu_custom_call.1} parent=1 // pred_fallthru
      _
    %s59 = sadd.s32 0, 1
    %p60 = scmp.lt.s32.totalorder %s59, 0
    %s61 = scalar_select %p60, %s59, 0
    %s62 = smul.u32 8, %s61
    %p63 = scmp.lt.s32.totalorder %s62, 7
    %s64 = scalar_select %p63, %s62, 7
    %s65 = smul.addr %s64, 8
    %s66 = scalar_lea.vmem %s1, %s65
    %s67 = sadd.s32 0, 1
    %p68 = scmp.lt.s32.totalorder %s67, 0
    %s69 = scalar_select %p68, %s67, 0
    %s70 = smul.u32 8, %s69
    %p71 = scmp.lt.s32.totalorder %s70, 7
    %s72 = scalar_select %p71, %s70, 7
    %s73 = smul.addr %s72, 8
    %s74 = scalar_lea.vmem %s1, %s73
    %s75 = sadd.s32 0, 1
    %p76 = scmp.lt.s32.totalorder %s75, 0
    %s77 = scalar_select %p76, %s75, 0
    %s78 = smul.u32 8, %s77
    %p79 = scmp.eq.s32.totalorder 0, 0
    // Predicated region
    $region38: #{tpu_custom_call.1} parent=1 // pred_check
      %p80 = pneg %p79
    $region39: #{tpu_custom_call.1} parent=1 // pred_check_branch
      %82 = sbr.rel (%p80) target = $region41
    $region40: #{tpu_custom_call.1} parent=1 // pred_region
      %v83 = vld [vmem:[%s7] sm:$0xff]
      %84 = vst [vmem:[#allocation3] sm:$0xff] %v83
      %v85 = vld [vmem:[%s0] sm:$0xff]
      %v86 = vld [vmem:[%s0 + $0x8] sm:$0xff]
      %v87 = vld [vmem:[%s0 + $0x10] sm:$0xff]
      %v88 = vld [vmem:[%s0 + $0x18] sm:$0xff]
      %v89 = vld [vmem:[%s0 + $0x20] sm:$0xff]
      %v90 = vld [vmem:[%s0 + $0x28] sm:$0xff]
      %v91 = vld [vmem:[%s0 + $0x30] sm:$0xff]
      %v92 = vld [vmem:[%s0 + $0x38] sm:$0xff]
      %v93 = vld [vmem:[%s2] sm:$0xff]
      %v94 = vld [vmem:[%s2 + $0x8] sm:$0xff]
      %v95 = vld [vmem:[%s4] sm:$0x1]
      %v97 = vlaneseq
      %v98 = vshrl.u32 %v97, 7
      %v99 = vsub.s32 0, %v98
      %v100 = vrot.slane %v95, %v99
      %vm102 = vcmask 130048
      %v104 = vsel %vm102, %v85, 0
      %v107 = vsel %vm102, %v86, 0
      %v110 = vsel %vm102, %v87, 0
      %v113 = vsel %vm102, %v88, 0
      %v116 = vsel %vm102, %v89, 0
      %v119 = vsel %vm102, %v90, 0
      %v122 = vsel %vm102, %v91, 0
      %v125 = vsel %vm102, %v92, 0
      %127 = vmatprep.subr.mxu0 0.0
      %128 = vmatpush1.msra.mxu0 0.0
      %129 = vmatprep.subr.mxu0 0.0
      %130 = vmatpush1.msra.mxu0 0.0
      %131 = vmatprep.subr.mxu0 0.0
      %132 = vmatpush1.msra.mxu0 0.0
      %133 = vmatprep.subr.mxu0 0.0
      %134 = vmatpush1.msra.mxu0 0.0
      %135 = vmatprep.subr.mxu0 0.0
      %136 = vmatpush1.msra.mxu0 0.0
      %137 = vmatprep.subr.mxu0 0.0
      %138 = vmatpush1.msra.mxu0 0.0
      %139 = vmatprep.subr.mxu0 0.0
      %140 = vmatpush1.msra.mxu0 0.0
      %141 = vmatprep.subr.mxu0 0.0
      %142 = vmatpush1.msra.mxu0 0.0
      %143 = vmatprep.subr.mxu0 0.0
      %144 = vmatpush1.msra.mxu0 0.0
      %145 = vmatprep.subr.mxu0 0.0
      %146 = vmatpush1.msra.mxu0 0.0
      %147 = vmatprep.subr.mxu0 0.0
      %148 = vmatpush1.msra.mxu0 0.0
      %149 = vmatprep.subr.mxu0 0.0
      %150 = vmatpush1.msra.mxu0 0.0
      %151 = vmatprep.subr.mxu0 0.0
      %152 = vmatpush1.msra.mxu0 0.0
      %153 = vmatprep.subr.mxu0 0.0
      %154 = vmatpush1.msra.mxu0 0.0
      %155 = vmatprep.subr.mxu0 0.0
      %156 = vmatpush1.msra.mxu0 %v94
      %157 = vmatprep.subr.mxu0 0.0
      %158 = vmatpush1.msra.mxu0 %v93
      %159 = vmatprep.subr.mxu0 0.0
      %160 = vmatpush2.msra.mxu0 0.0
      %161 = vmatprep.subr.mxu0 0.0
      %162 = vmatpush2.msra.mxu0 0.0
      %163 = vmatprep.subr.mxu0 0.0
      %164 = vmatpush2.msra.mxu0 0.0
      %165 = vmatprep.subr.mxu0 0.0
      %166 = vmatpush2.msra.mxu0 0.0
      %167 = vmatprep.subr.mxu0 0.0
      %168 = vmatpush2.msra.mxu0 0.0
      %169 = vmatprep.subr.mxu0 0.0
      %170 = vmatpush2.msra.mxu0 0.0
      %171 = vmatprep.subr.mxu0 0.0
      %172 = vmatpush2.msra.mxu0 0.0
      %173 = vmatprep.subr.mxu0 0.0
      %174 = vmatpush2.msra.mxu0 0.0
      %175 = vmatprep.subr.mxu0 0.0
      %176 = vmatpush2.msra.mxu0 0.0
      %177 = vmatprep.subr.mxu0 0.0
      %178 = vmatpush2.msra.mxu0 0.0
      %179 = vmatprep.subr.mxu0 0.0
      %180 = vmatpush2.msra.mxu0 0.0
      %181 = vmatprep.subr.mxu0 0.0
      %182 = vmatpush2.msra.mxu0 0.0
      %183 = vmatprep.subr.mxu0 0.0
      %184 = vmatpush2.msra.mxu0 0.0
      %185 = vmatprep.subr.mxu0 0.0
      %186 = vmatpush2.msra.mxu0 0.0
      %187 = vmatprep.subr.mxu0 0.0
      %188 = vmatpush2.msra.mxu0 0.0
      %189 = vmatprep.subr.mxu0 0.0
      %190 = vmatpush2.msra.mxu0 0.0
      %191 = vmatprep.mubr.f32.mxu0 0.0
      %192 = vmatmul.mubr.f32.gmra.mxu0 %v104
      %v193 = vpop.f32.mrf.mxu0
      %v194 = vadd.f32 %v100, %v193
      %v195 = vpop.f32.mrf.mxu0
      %196 = vmatprep.mubr.f32.mxu0 0.0
      %197 = vmatmul.mubr.f32.gmra.mxu0 %v107
      %v198 = vpop.f32.mrf.mxu0
      %v199 = vadd.f32 %v100, %v198
      %v200 = vpop.f32.mrf.mxu0
      %201 = vmatprep.mubr.f32.mxu0 0.0
      %202 = vmatmul.mubr.f32.gmra.mxu0 %v110
      %v203 = vpop.f32.mrf.mxu0
      %v204 = vadd.f32 %v100, %v203
      %v205 = vpop.f32.mrf.mxu0
      %206 = vmatprep.mubr.f32.mxu0 0.0
      %207 = vmatmul.mubr.f32.gmra.mxu0 %v113
      %v208 = vpop.f32.mrf.mxu0
      %v209 = vadd.f32 %v100, %v208
      %v210 = vpop.f32.mrf.mxu0
      %211 = vmatprep.mubr.f32.mxu0 0.0
      %212 = vmatmul.mubr.f32.gmra.mxu0 %v116
      %v213 = vpop.f32.mrf.mxu0
      %v214 = vadd.f32 %v100, %v213
      %v215 = vpop.f32.mrf.mxu0
      %216 = vmatprep.mubr.f32.mxu0 0.0
      %217 = vmatmul.mubr.f32.gmra.mxu0 %v119
      %v218 = vpop.f32.mrf.mxu0
      %v219 = vadd.f32 %v100, %v218
      %v220 = vpop.f32.mrf.mxu0
      %221 = vmatprep.mubr.f32.mxu0 0.0
      %222 = vmatmul.mubr.f32.gmra.mxu0 %v122
      %v223 = vpop.f32.mrf.mxu0
      %v224 = vadd.f32 %v100, %v223
      %v225 = vpop.f32.mrf.mxu0
      %226 = vmatprep.mubr.f32.mxu0 0.0
      %227 = vmatmul.mubr.f32.gmra.mxu0 %v125
      %v228 = vpop.f32.mrf.mxu0
      %v229 = vadd.f32 %v100, %v228
      %v230 = vpop.f32.mrf.mxu0
      %231 = vdwg.mxu0
      %232 = vst [vmem:[#allocation2] sm:$0xff] %v194
      %233 = vst [vmem:[#allocation2 + $0x8] sm:$0xff] %v199
      %234 = vst [vmem:[#allocation2 + $0x10] sm:$0xff] %v204
      %235 = vst [vmem:[#allocation2 + $0x18] sm:$0xff] %v209
      %236 = vst [vmem:[#allocation2 + $0x20] sm:$0xff] %v214
      %237 = vst [vmem:[#allocation2 + $0x28] sm:$0xff] %v219
      %238 = vst [vmem:[#allocation2 + $0x30] sm:$0xff] %v224
      %239 = vst [vmem:[#allocation2 + $0x38] sm:$0xff] %v229
    $region41: #{tpu_custom_call.1} parent=1 // pred_fallthru
      _
    %v240 = vld [vmem:[%s3] sm:$0xff]
    %v241 = vld [vmem:[%s3 + $0x8] sm:$0xff]
    %v242 = vld [vmem:[%s3 + $0x10] sm:$0xff]
    %v243 = vld [vmem:[%s3 + $0x18] sm:$0xff]
    %v244 = vld [vmem:[%s3 + $0x20] sm:$0xff]
    %v245 = vld [vmem:[%s3 + $0x28] sm:$0xff]
    %v246 = vld [vmem:[%s3 + $0x30] sm:$0xff]
    %v247 = vld [vmem:[%s3 + $0x38] sm:$0xff]
    %v248 = vld [vmem:[%s3 + $0x40] sm:$0xff]
    %v249 = vld [vmem:[%s3 + $0x48] sm:$0xff]
    %v250 = vld [vmem:[%s3 + $0x50] sm:$0xff]
    %v251 = vld [vmem:[%s3 + $0x58] sm:$0xff]
    %v252 = vld [vmem:[%s3 + $0x60] sm:$0xff]
    %v253 = vld [vmem:[%s3 + $0x68] sm:$0xff]
    %v254 = vld [vmem:[%s3 + $0x70] sm:$0xff]
    %v255 = vld [vmem:[%s3 + $0x78] sm:$0xff]
    %v256 = vld [vmem:[%s2] sm:$0xff]
    %v257 = vld [vmem:[%s2 + $0x8] sm:$0xff]
    %v258 = vld [vmem:[%s4] sm:$0x1]
    %v260 = vlaneseq
    %v261 = vshrl.u32 %v260, 7
    %v262 = vsub.s32 0, %v261
    %v263 = vrot.slane %v258, %v262
    %s265 = ssub.s32 0, 0
    %s266 = ssub.s32 0, 0
    %p267 = scmp.ne.s32.totalorder 0, 0
    %p268 = scmp.lt.s32.totalorder 0, 0
    %p269 = pnand %p268, %p267
    %p270 = pneg %p269
    %s271 = sadd.s32 0, 2
    %s272 = scalar_select %p270, %s271, 0
    %s273 = smul.u32 %s272, 64
    %s274 = sadd.s32 0, 1
    %p275 = scmp.lt.s32.totalorder %s274, 0
    %s276 = ssub.s32 0, %s274
    %s277 = scalar_select %p275, %s276, %s274
    %s278 = sand.u32 %s277, 1
    %s279 = ssub.s32 0, %s278
    %s280 = scalar_select %p275, %s279, %s278
    %p281 = scmp.ne.s32.totalorder %s280, 0
    %p282 = scmp.lt.s32.totalorder %s280, 0
    %p283 = pnand %p282, %p281
    %p284 = pneg %p283
    %s285 = sadd.s32 %s280, 2
    %s286 = scalar_select %p284, %s285, %s280
    %s287 = smul.u32 %s286, 64
    %p288 = scmp.lt.s32.totalorder 0, 0
    // Predicated region
    $region42: #{tpu_custom_call.1} parent=1 // pred_check
      %p289 = pneg %p288
    $region43: #{tpu_custom_call.1} parent=1 // pred_check_branch
      %291 = sbr.rel (%p289) target = $region45
    $region44: #{tpu_custom_call.1} parent=1 // pred_region
      %v292 = vld [vmem:[#allocation3] sm:$0xff]
      %s293 = scalar_lea.vmem [#allocation2], %s273
      %v294 = vld [vmem:[%s293] sm:$0xff]
      %295 = vmatprep.subr.mxu0 0.0
      %296 = vmatpush1.msra.mxu0 %v255
      %297 = vmatprep.subr.mxu0 0.0
      %298 = vmatpush1.msra.mxu0 %v254
      %299 = vmatprep.subr.mxu0 0.0
      %300 = vmatpush1.msra.mxu0 %v253
      %301 = vmatprep.subr.mxu0 0.0
      %302 = vmatpush1.msra.mxu0 %v252
      %303 = vmatprep.subr.mxu0 0.0
      %304 = vmatpush1.msra.mxu0 %v251
      %305 = vmatprep.subr.mxu0 0.0
      %306 = vmatpush1.msra.mxu0 %v250
      %307 = vmatprep.subr.mxu0 0.0
      %308 = vmatpush1.msra.mxu0 %v249
      %309 = vmatprep.subr.mxu0 0.0
      %310 = vmatpush1.msra.mxu0 %v248
      %311 = vmatprep.subr.mxu0 0.0
      %312 = vmatpush1.msra.mxu0 %v247
      %313 = vmatprep.subr.mxu0 0.0
      %314 = vmatpush1.msra.mxu0 %v246
      %315 = vmatprep.subr.mxu0 0.0
      %316 = vmatpush1.msra.mxu0 %v245
      %317 = vmatprep.subr.mxu0 0.0
      %318 = vmatpush1.msra.mxu0 %v244
      %319 = vmatprep.subr.mxu0 0.0
      %320 = vmatpush1.msra.mxu0 %v243
      %321 = vmatprep.subr.mxu0 0.0
      %322 = vmatpush1.msra.mxu0 %v242
      %323 = vmatprep.subr.mxu0 0.0
      %324 = vmatpush1.msra.mxu0 %v241
      %325 = vmatprep.subr.mxu0 0.0
      %326 = vmatpush1.msra.mxu0 %v240
      %327 = vmatprep.subr.mxu0 0.0
      %328 = vmatpush2.msra.mxu0 0.0
      %329 = vmatprep.subr.mxu0 0.0
      %330 = vmatpush2.msra.mxu0 0.0
      %331 = vmatprep.subr.mxu0 0.0
      %332 = vmatpush2.msra.mxu0 0.0
      %333 = vmatprep.subr.mxu0 0.0
      %334 = vmatpush2.msra.mxu0 0.0
      %335 = vmatprep.subr.mxu0 0.0
      %336 = vmatpush2.msra.mxu0 0.0
      %337 = vmatprep.subr.mxu0 0.0
      %338 = vmatpush2.msra.mxu0 0.0
      %339 = vmatprep.subr.mxu0 0.0
      %340 = vmatpush2.msra.mxu0 0.0
      %341 = vmatprep.subr.mxu0 0.0
      %342 = vmatpush2.msra.mxu0 0.0
      %343 = vmatprep.subr.mxu0 0.0
      %344 = vmatpush2.msra.mxu0 0.0
      %345 = vmatprep.subr.mxu0 0.0
      %346 = vmatpush2.msra.mxu0 0.0
      %347 = vmatprep.subr.mxu0 0.0
      %348 = vmatpush2.msra.mxu0 0.0
      %349 = vmatprep.subr.mxu0 0.0
      %350 = vmatpush2.msra.mxu0 0.0
      %351 = vmatprep.subr.mxu0 0.0
      %352 = vmatpush2.msra.mxu0 0.0
      %353 = vmatprep.subr.mxu0 0.0
      %354 = vmatpush2.msra.mxu0 0.0
      %355 = vmatprep.subr.mxu0 0.0
      %356 = vmatpush2.msra.mxu0 0.0
      %357 = vmatprep.subr.mxu0 0.0
      %358 = vmatpush2.msra.mxu0 0.0
      %359 = vmatprep.mubr.f32.mxu0 0.0
      %360 = vmatmul.mubr.f32.gmra.mxu0 %v292
      %v361 = vpop.f32.mrf.mxu0
      %v362 = vadd.f32 0.0, %v361
      %v363 = vpop.f32.mrf.mxu0
      %364 = vdwg.mxu0
      %v365 = vadd.f32 %v294, %v362
      %v366 = vtanh.pop %v365
      %v367 = vld [vmem:[%s74] sm:$0xff]
      %vm368 = vcmask 130048
      %v370 = vsel %vm368, %v367, 0
      %372 = vmatprep.subr.mxu0 0.0
      %373 = vmatpush1.msra.mxu0 0.0
      %374 = vmatprep.subr.mxu0 0.0
      %375 = vmatpush1.msra.mxu0 0.0
      %376 = vmatprep.subr.mxu0 0.0
      %377 = vmatpush1.msra.mxu0 0.0
      %378 = vmatprep.subr.mxu0 0.0
      %379 = vmatpush1.msra.mxu0 0.0
      %380 = vmatprep.subr.mxu0 0.0
      %381 = vmatpush1.msra.mxu0 0.0
      %382 = vmatprep.subr.mxu0 0.0
      %383 = vmatpush1.msra.mxu0 0.0
      %384 = vmatprep.subr.mxu0 0.0
      %385 = vmatpush1.msra.mxu0 0.0
      %386 = vmatprep.subr.mxu0 0.0
      %387 = vmatpush1.msra.mxu0 0.0
      %388 = vmatprep.subr.mxu0 0.0
      %389 = vmatpush1.msra.mxu0 0.0
      %390 = vmatprep.subr.mxu0 0.0
      %391 = vmatpush1.msra.mxu0 0.0
      %392 = vmatprep.subr.mxu0 0.0
      %393 = vmatpush1.msra.mxu0 0.0
      %394 = vmatprep.subr.mxu0 0.0
      %395 = vmatpush1.msra.mxu0 0.0
      %396 = vmatprep.subr.mxu0 0.0
      %397 = vmatpush1.msra.mxu0 0.0
      %398 = vmatprep.subr.mxu0 0.0
      %399 = vmatpush1.msra.mxu0 0.0
      %400 = vmatprep.subr.mxu0 0.0
      %401 = vmatpush1.msra.mxu0 %v257
      %402 = vmatprep.subr.mxu0 0.0
      %403 = vmatpush1.msra.mxu0 %v256
      %404 = vmatprep.subr.mxu0 0.0
      %405 = vmatpush2.msra.mxu0 0.0
      %406 = vmatprep.subr.mxu0 0.0
      %407 = vmatpush2.msra.mxu0 0.0
      %408 = vmatprep.subr.mxu0 0.0
      %409 = vmatpush2.msra.mxu0 0.0
      %410 = vmatprep.subr.mxu0 0.0
      %411 = vmatpush2.msra.mxu0 0.0
      %412 = vmatprep.subr.mxu0 0.0
      %413 = vmatpush2.msra.mxu0 0.0
      %414 = vmatprep.subr.mxu0 0.0
      %415 = vmatpush2.msra.mxu0 0.0
      %416 = vmatprep.subr.mxu0 0.0
      %417 = vmatpush2.msra.mxu0 0.0
      %418 = vmatprep.subr.mxu0 0.0
      %419 = vmatpush2.msra.mxu0 0.0
      %420 = vmatprep.subr.mxu0 0.0
      %421 = vmatpush2.msra.mxu0 0.0
      %422 = vmatprep.subr.mxu0 0.0
      %423 = vmatpush2.msra.mxu0 0.0
      %424 = vmatprep.subr.mxu0 0.0
      %425 = vmatpush2.msra.mxu0 0.0
      %426 = vmatprep.subr.mxu0 0.0
      %427 = vmatpush2.msra.mxu0 0.0
      %428 = vmatprep.subr.mxu0 0.0
      %429 = vmatpush2.msra.mxu0 0.0
      %430 = vmatprep.subr.mxu0 0.0
      %431 = vmatpush2.msra.mxu0 0.0
      %432 = vmatprep.subr.mxu0 0.0
      %433 = vmatpush2.msra.mxu0 0.0
      %434 = vmatprep.subr.mxu0 0.0
      %435 = vmatpush2.msra.mxu0 0.0
      %436 = vmatprep.mubr.f32.mxu0 0.0
      %437 = vmatmul.mubr.f32.gmra.mxu0 %v370
      %v438 = vpop.f32.mrf.mxu0
      %v439 = vadd.f32 %v263, %v438
      %v440 = vpop.f32.mrf.mxu0
      %441 = vdwg.mxu0
      %s442 = scalar_lea.vmem [#allocation2], %s287
      %443 = vst [vmem:[%s442] sm:$0xff] %v439
      %s444 = sadd.s32 %s273, 8
      %s445 = scalar_lea.vmem [#allocation2], %s444
      %v446 = vld [vmem:[%s445] sm:$0xff]
      %447 = vmatprep.subr.mxu0 0.0
      %448 = vmatpush1.msra.mxu0 %v255
      %449 = vmatprep.subr.mxu0 0.0
      %450 = vmatpush1.msra.mxu0 %v254
      %451 = vmatprep.subr.mxu0 0.0
      %452 = vmatpush1.msra.mxu0 %v253
      %453 = vmatprep.subr.mxu0 0.0
      %454 = vmatpush1.msra.mxu0 %v252
      %455 = vmatprep.subr.mxu0 0.0
      %456 = vmatpush1.msra.mxu0 %v251
      %457 = vmatprep.subr.mxu0 0.0
      %458 = vmatpush1.msra.mxu0 %v250
      %459 = vmatprep.subr.mxu0 0.0
      %460 = vmatpush1.msra.mxu0 %v249
      %461 = vmatprep.subr.mxu0 0.0
      %462 = vmatpush1.msra.mxu0 %v248
      %463 = vmatprep.subr.mxu0 0.0
      %464 = vmatpush1.msra.mxu0 %v247
      %465 = vmatprep.subr.mxu0 0.0
      %466 = vmatpush1.msra.mxu0 %v246
      %467 = vmatprep.subr.mxu0 0.0
      %468 = vmatpush1.msra.mxu0 %v245
      %469 = vmatprep.subr.mxu0 0.0
      %470 = vmatpush1.msra.mxu0 %v244
      %471 = vmatprep.subr.mxu0 0.0
      %472 = vmatpush1.msra.mxu0 %v243
      %473 = vmatprep.subr.mxu0 0.0
      %474 = vmatpush1.msra.mxu0 %v242
      %475 = vmatprep.subr.mxu0 0.0
      %476 = vmatpush1.msra.mxu0 %v241
      %477 = vmatprep.subr.mxu0 0.0
      %478 = vmatpush1.msra.mxu0 %v240
      %479 = vmatprep.subr.mxu0 0.0
      %480 = vmatpush2.msra.mxu0 0.0
      %481 = vmatprep.subr.mxu0 0.0
      %482 = vmatpush2.msra.mxu0 0.0
      %483 = vmatprep.subr.mxu0 0.0
      %484 = vmatpush2.msra.mxu0 0.0
      %485 = vmatprep.subr.mxu0 0.0
      %486 = vmatpush2.msra.mxu0 0.0
      %487 = vmatprep.subr.mxu0 0.0
      %488 = vmatpush2.msra.mxu0 0.0
      %489 = vmatprep.subr.mxu0 0.0
      %490 = vmatpush2.msra.mxu0 0.0
      %491 = vmatprep.subr.mxu0 0.0
      %492 = vmatpush2.msra.mxu0 0.0
      %493 = vmatprep.subr.mxu0 0.0
      %494 = vmatpush2.msra.mxu0 0.0
      %495 = vmatprep.subr.mxu0 0.0
      %496 = vmatpush2.msra.mxu0 0.0
      %497 = vmatprep.subr.mxu0 0.0
      %498 = vmatpush2.msra.mxu0 0.0
      %499 = vmatprep.subr.mxu0 0.0
      %500 = vmatpush2.msra.mxu0 0.0
      %501 = vmatprep.subr.mxu0 0.0
      %502 = vmatpush2.msra.mxu0 0.0
      %503 = vmatprep.subr.mxu0 0.0
      %504 = vmatpush2.msra.mxu0 0.0
      %505 = vmatprep.subr.mxu0 0.0
      %506 = vmatpush2.msra.mxu0 0.0
      %507 = vmatprep.subr.mxu0 0.0
      %508 = vmatpush2.msra.mxu0 0.0
      %509 = vmatprep.subr.mxu0 0.0
      %510 = vmatpush2.msra.mxu0 0.0
      %511 = vmatprep.mubr.f32.mxu0 0.0
      %512 = vmatmul.mubr.f32.gmra.mxu0 %v366
      %v513 = vpop.f32.mrf.mxu0
      %v514 = vadd.f32 0.0, %v513
      %v515 = vpop.f32.mrf.mxu0
      %516 = vdwg.mxu0
      %v517 = vadd.f32 %v446, %v514
      %v518 = vtanh.pop %v517
      %s519 = scalar_lea.vmem %s74, 8
      %v520 = vld [vmem:[%s519] sm:$0xff]
      %v522 = vsel %vm368, %v520, 0
      %524 = vmatprep.subr.mxu0 0.0
      %525 = vmatpush1.msra.mxu0 0.0
      %526 = vmatprep.subr.mxu0 0.0
      %527 = vmatpush1.msra.mxu0 0.0
      %528 = vmatprep.subr.mxu0 0.0
      %529 = vmatpush1.msra.mxu0 0.0
      %530 = vmatprep.subr.mxu0 0.0
      %531 = vmatpush1.msra.mxu0 0.0
      %532 = vmatprep.subr.mxu0 0.0
      %533 = vmatpush1.msra.mxu0 0.0
      %534 = vmatprep.subr.mxu0 0.0
      %535 = vmatpush1.msra.mxu0 0.0
      %536 = vmatprep.subr.mxu0 0.0
      %537 = vmatpush1.msra.mxu0 0.0
      %538 = vmatprep.subr.mxu0 0.0
      %539 = vmatpush1.msra.mxu0 0.0
      %540 = vmatprep.subr.mxu0 0.0
      %541 = vmatpush1.msra.mxu0 0.0
      %542 = vmatprep.subr.mxu0 0.0
      %543 = vmatpush1.msra.mxu0 0.0
      %544 = vmatprep.subr.mxu0 0.0
      %545 = vmatpush1.msra.mxu0 0.0
      %546 = vmatprep.subr.mxu0 0.0
      %547 = vmatpush1.msra.mxu0 0.0
      %548 = vmatprep.subr.mxu0 0.0
      %549 = vmatpush1.msra.mxu0 0.0
      %550 = vmatprep.subr.mxu0 0.0
      %551 = vmatpush1.msra.mxu0 0.0
      %552 = vmatprep.subr.mxu0 0.0
      %553 = vmatpush1.msra.mxu0 %v257
      %554 = vmatprep.subr.mxu0 0.0
      %555 = vmatpush1.msra.mxu0 %v256
      %556 = vmatprep.subr.mxu0 0.0
      %557 = vmatpush2.msra.mxu0 0.0
      %558 = vmatprep.subr.mxu0 0.0
      %559 = vmatpush2.msra.mxu0 0.0
      %560 = vmatprep.subr.mxu0 0.0
      %561 = vmatpush2.msra.mxu0 0.0
      %562 = vmatprep.subr.mxu0 0.0
      %563 = vmatpush2.msra.mxu0 0.0
      %564 = vmatprep.subr.mxu0 0.0
      %565 = vmatpush2.msra.mxu0 0.0
      %566 = vmatprep.subr.mxu0 0.0
      %567 = vmatpush2.msra.mxu0 0.0
      %568 = vmatprep.subr.mxu0 0.0
      %569 = vmatpush2.msra.mxu0 0.0
      %570 = vmatprep.subr.mxu0 0.0
      %571 = vmatpush2.msra.mxu0 0.0
      %572 = vmatprep.subr.mxu0 0.0
      %573 = vmatpush2.msra.mxu0 0.0
      %574 = vmatprep.subr.mxu0 0.0
      %575 = vmatpush2.msra.mxu0 0.0
      %576 = vmatprep.subr.mxu0 0.0
      %577 = vmatpush2.msra.mxu0 0.0
      %578 = vmatprep.subr.mxu0 0.0
      %579 = vmatpush2.msra.mxu0 0.0
      %580 = vmatprep.subr.mxu0 0.0
      %581 = vmatpush2.msra.mxu0 0.0
      %582 = vmatprep.subr.mxu0 0.0
      %583 = vmatpush2.msra.mxu0 0.0
      %584 = vmatprep.subr.mxu0 0.0
      %585 = vmatpush2.msra.mxu0 0.0
      %586 = vmatprep.subr.mxu0 0.0
      %587 = vmatpush2.msra.mxu0 0.0
      %588 = vmatprep.mubr.f32.mxu0 0.0
      %589 = vmatmul.mubr.f32.gmra.mxu0 %v522
      %v590 = vpop.f32.mrf.mxu0
      %v591 = vadd.f32 %v263, %v590
      %v592 = vpop.f32.mrf.mxu0
      %593 = vdwg.mxu0
      %s594 = sadd.s32 %s287, 8
      %s595 = scalar_lea.vmem [#allocation2], %s594
      %596 = vst [vmem:[%s595] sm:$0xff] %v591
      %s597 = sadd.s32 %s273, 16
      %s598 = scalar_lea.vmem [#allocation2], %s597
      %v599 = vld [vmem:[%s598] sm:$0xff]
      %600 = vmatprep.subr.mxu0 0.0
      %601 = vmatpush1.msra.mxu0 %v255
      %602 = vmatprep.subr.mxu0 0.0
      %603 = vmatpush1.msra.mxu0 %v254
      %604 = vmatprep.subr.mxu0 0.0
      %605 = vmatpush1.msra.mxu0 %v253
      %606 = vmatprep.subr.mxu0 0.0
      %607 = vmatpush1.msra.mxu0 %v252
      %608 = vmatprep.subr.mxu0 0.0
      %609 = vmatpush1.msra.mxu0 %v251
      %610 = vmatprep.subr.mxu0 0.0
      %611 = vmatpush1.msra.mxu0 %v250
      %612 = vmatprep.subr.mxu0 0.0
      %613 = vmatpush1.msra.mxu0 %v249
      %614 = vmatprep.subr.mxu0 0.0
      %615 = vmatpush1.msra.mxu0 %v248
      %616 = vmatprep.subr.mxu0 0.0
      %617 = vmatpush1.msra.mxu0 %v247
      %618 = vmatprep.subr.mxu0 0.0
      %619 = vmatpush1.msra.mxu0 %v246
      %620 = vmatprep.subr.mxu0 0.0
      %621 = vmatpush1.msra.mxu0 %v245
      %622 = vmatprep.subr.mxu0 0.0
      %623 = vmatpush1.msra.mxu0 %v244
      %624 = vmatprep.subr.mxu0 0.0
      %625 = vmatpush1.msra.mxu0 %v243
      %626 = vmatprep.subr.mxu0 0.0
      %627 = vmatpush1.msra.mxu0 %v242
      %628 = vmatprep.subr.mxu0 0.0
      %629 = vmatpush1.msra.mxu0 %v241
      %630 = vmatprep.subr.mxu0 0.0
      %631 = vmatpush1.msra.mxu0 %v240
      %632 = vmatprep.subr.mxu0 0.0
      %633 = vmatpush2.msra.mxu0 0.0
      %634 = vmatprep.subr.mxu0 0.0
      %635 = vmatpush2.msra.mxu0 0.0
      %636 = vmatprep.subr.mxu0 0.0
      %637 = vmatpush2.msra.mxu0 0.0
      %638 = vmatprep.subr.mxu0 0.0
      %639 = vmatpush2.msra.mxu0 0.0
      %640 = vmatprep.subr.mxu0 0.0
      %641 = vmatpush2.msra.mxu0 0.0
      %642 = vmatprep.subr.mxu0 0.0
      %643 = vmatpush2.msra.mxu0 0.0
      %644 = vmatprep.subr.mxu0 0.0
      %645 = vmatpush2.msra.mxu0 0.0
      %646 = vmatprep.subr.mxu0 0.0
      %647 = vmatpush2.msra.mxu0 0.0
      %648 = vmatprep.subr.mxu0 0.0
      %649 = vmatpush2.msra.mxu0 0.0
      %650 = vmatprep.subr.mxu0 0.0
      %651 = vmatpush2.msra.mxu0 0.0
      %652 = vmatprep.subr.mxu0 0.0
      %653 = vmatpush2.msra.mxu0 0.0
      %654 = vmatprep.subr.mxu0 0.0
      %655 = vmatpush2.msra.mxu0 0.0
      %656 = vmatprep.subr.mxu0 0.0
      %657 = vmatpush2.msra.mxu0 0.0
      %658 = vmatprep.subr.mxu0 0.0
      %659 = vmatpush2.msra.mxu0 0.0
      %660 = vmatprep.subr.mxu0 0.0
      %661 = vmatpush2.msra.mxu0 0.0
      %662 = vmatprep.subr.mxu0 0.0
      %663 = vmatpush2.msra.mxu0 0.0
      %664 = vmatprep.mubr.f32.mxu0 0.0
      %665 = vmatmul.mubr.f32.gmra.mxu0 %v518
      %v666 = vpop.f32.mrf.mxu0
      %v667 = vadd.f32 0.0, %v666
      %v668 = vpop.f32.mrf.mxu0
      %669 = vdwg.mxu0
      %v670 = vadd.f32 %v599, %v667
      %v671 = vtanh.pop %v670
      %s672 = scalar_lea.vmem %s74, 16
      %v673 = vld [vmem:[%s672] sm:$0xff]
      %v675 = vsel %vm368, %v673, 0
      %677 = vmatprep.subr.mxu0 0.0
      %678 = vmatpush1.msra.mxu0 0.0
      %679 = vmatprep.subr.mxu0 0.0
      %680 = vmatpush1.msra.mxu0 0.0
      %681 = vmatprep.subr.mxu0 0.0
      %682 = vmatpush1.msra.mxu0 0.0
      %683 = vmatprep.subr.mxu0 0.0
      %684 = vmatpush1.msra.mxu0 0.0
      %685 = vmatprep.subr.mxu0 0.0
      %686 = vmatpush1.msra.mxu0 0.0
      %687 = vmatprep.subr.mxu0 0.0
      %688 = vmatpush1.msra.mxu0 0.0
      %689 = vmatprep.subr.mxu0 0.0
      %690 = vmatpush1.msra.mxu0 0.0
      %691 = vmatprep.subr.mxu0 0.0
      %692 = vmatpush1.msra.mxu0 0.0
      %693 = vmatprep.subr.mxu0 0.0
      %694 = vmatpush1.msra.mxu0 0.0
      %695 = vmatprep.subr.mxu0 0.0
      %696 = vmatpush1.msra.mxu0 0.0
      %697 = vmatprep.subr.mxu0 0.0
      %698 = vmatpush1.msra.mxu0 0.0
      %699 = vmatprep.subr.mxu0 0.0
      %700 = vmatpush1.msra.mxu0 0.0
      %701 = vmatprep.subr.mxu0 0.0
      %702 = vmatpush1.msra.mxu0 0.0
      %703 = vmatprep.subr.mxu0 0.0
      %704 = vmatpush1.msra.mxu0 0.0
      %705 = vmatprep.subr.mxu0 0.0
      %706 = vmatpush1.msra.mxu0 %v257
      %707 = vmatprep.subr.mxu0 0.0
      %708 = vmatpush1.msra.mxu0 %v256
      %709 = vmatprep.subr.mxu0 0.0
      %710 = vmatpush2.msra.mxu0 0.0
      %711 = vmatprep.subr.mxu0 0.0
      %712 = vmatpush2.msra.mxu0 0.0
      %713 = vmatprep.subr.mxu0 0.0
      %714 = vmatpush2.msra.mxu0 0.0
      %715 = vmatprep.subr.mxu0 0.0
      %716 = vmatpush2.msra.mxu0 0.0
      %717 = vmatprep.subr.mxu0 0.0
      %718 = vmatpush2.msra.mxu0 0.0
      %719 = vmatprep.subr.mxu0 0.0
      %720 = vmatpush2.msra.mxu0 0.0
      %721 = vmatprep.subr.mxu0 0.0
      %722 = vmatpush2.msra.mxu0 0.0
      %723 = vmatprep.subr.mxu0 0.0
      %724 = vmatpush2.msra.mxu0 0.0
      %725 = vmatprep.subr.mxu0 0.0
      %726 = vmatpush2.msra.mxu0 0.0
      %727 = vmatprep.subr.mxu0 0.0
      %728 = vmatpush2.msra.mxu0 0.0
      %729 = vmatprep.subr.mxu0 0.0
      %730 = vmatpush2.msra.mxu0 0.0
      %731 = vmatprep.subr.mxu0 0.0
      %732 = vmatpush2.msra.mxu0 0.0
      %733 = vmatprep.subr.mxu0 0.0
      %734 = vmatpush2.msra.mxu0 0.0
      %735 = vmatprep.subr.mxu0 0.0
      %736 = vmatpush2.msra.mxu0 0.0
      %737 = vmatprep.subr.mxu0 0.0
      %738 = vmatpush2.msra.mxu0 0.0
      %739 = vmatprep.subr.mxu0 0.0
      %740 = vmatpush2.msra.mxu0 0.0
      %741 = vmatprep.mubr.f32.mxu0 0.0
      %742 = vmatmul.mubr.f32.gmra.mxu0 %v675
      %v743 = vpop.f32.mrf.mxu0
      %v744 = vadd.f32 %v263, %v743
      %v745 = vpop.f32.mrf.mxu0
      %746 = vdwg.mxu0
      %s747 = sadd.s32 %s287, 16
      %s748 = scalar_lea.vmem [#allocation2], %s747
      %749 = vst [vmem:[%s748] sm:$0xff] %v744
      %s750 = sadd.s32 %s273, 24
      %s751 = scalar_lea.vmem [#allocation2], %s750
      %v752 = vld [vmem:[%s751] sm:$0xff]
      %753 = vmatprep.subr.mxu0 0.0
      %754 = vmatpush1.msra.mxu0 %v255
      %755 = vmatprep.subr.mxu0 0.0
      %756 = vmatpush1.msra.mxu0 %v254
      %757 = vmatprep.subr.mxu0 0.0
      %758 = vmatpush1.msra.mxu0 %v253
      %759 = vmatprep.subr.mxu0 0.0
      %760 = vmatpush1.msra.mxu0 %v252
      %761 = vmatprep.subr.mxu0 0.0
      %762 = vmatpush1.msra.mxu0 %v251
      %763 = vmatprep.subr.mxu0 0.0
      %764 = vmatpush1.msra.mxu0 %v250
      %765 = vmatprep.subr.mxu0 0.0
      %766 = vmatpush1.msra.mxu0 %v249
      %767 = vmatprep.subr.mxu0 0.0
      %768 = vmatpush1.msra.mxu0 %v248
      %769 = vmatprep.subr.mxu0 0.0
      %770 = vmatpush1.msra.mxu0 %v247
      %771 = vmatprep.subr.mxu0 0.0
      %772 = vmatpush1.msra.mxu0 %v246
      %773 = vmatprep.subr.mxu0 0.0
      %774 = vmatpush1.msra.mxu0 %v245
      %775 = vmatprep.subr.mxu0 0.0
      %776 = vmatpush1.msra.mxu0 %v244
      %777 = vmatprep.subr.mxu0 0.0
      %778 = vmatpush1.msra.mxu0 %v243
      %779 = vmatprep.subr.mxu0 0.0
      %780 = vmatpush1.msra.mxu0 %v242
      %781 = vmatprep.subr.mxu0 0.0
      %782 = vmatpush1.msra.mxu0 %v241
      %783 = vmatprep.subr.mxu0 0.0
      %784 = vmatpush1.msra.mxu0 %v240
      %785 = vmatprep.subr.mxu0 0.0
      %786 = vmatpush2.msra.mxu0 0.0
      %787 = vmatprep.subr.mxu0 0.0
      %788 = vmatpush2.msra.mxu0 0.0
      %789 = vmatprep.subr.mxu0 0.0
      %790 = vmatpush2.msra.mxu0 0.0
      %791 = vmatprep.subr.mxu0 0.0
      %792 = vmatpush2.msra.mxu0 0.0
      %793 = vmatprep.subr.mxu0 0.0
      %794 = vmatpush2.msra.mxu0 0.0
      %795 = vmatprep.subr.mxu0 0.0
      %796 = vmatpush2.msra.mxu0 0.0
      %797 = vmatprep.subr.mxu0 0.0
      %798 = vmatpush2.msra.mxu0 0.0
      %799 = vmatprep.subr.mxu0 0.0
      %800 = vmatpush2.msra.mxu0 0.0
      %801 = vmatprep.subr.mxu0 0.0
      %802 = vmatpush2.msra.mxu0 0.0
      %803 = vmatprep.subr.mxu0 0.0
      %804 = vmatpush2.msra.mxu0 0.0
      %805 = vmatprep.subr.mxu0 0.0
      %806 = vmatpush2.msra.mxu0 0.0
      %807 = vmatprep.subr.mxu0 0.0
      %808 = vmatpush2.msra.mxu0 0.0
      %809 = vmatprep.subr.mxu0 0.0
      %810 = vmatpush2.msra.mxu0 0.0
      %811 = vmatprep.subr.mxu0 0.0
      %812 = vmatpush2.msra.mxu0 0.0
      %813 = vmatprep.subr.mxu0 0.0
      %814 = vmatpush2.msra.mxu0 0.0
      %815 = vmatprep.subr.mxu0 0.0
      %816 = vmatpush2.msra.mxu0 0.0
      %817 = vmatprep.mubr.f32.mxu0 0.0
      %818 = vmatmul.mubr.f32.gmra.mxu0 %v671
      %v819 = vpop.f32.mrf.mxu0
      %v820 = vadd.f32 0.0, %v819
      %v821 = vpop.f32.mrf.mxu0
      %822 = vdwg.mxu0
      %v823 = vadd.f32 %v752, %v820
      %v824 = vtanh.pop %v823
      %s825 = scalar_lea.vmem %s74, 24
      %v826 = vld [vmem:[%s825] sm:$0xff]
      %v828 = vsel %vm368, %v826, 0
      %830 = vmatprep.subr.mxu0 0.0
      %831 = vmatpush1.msra.mxu0 0.0
      %832 = vmatprep.subr.mxu0 0.0
      %833 = vmatpush1.msra.mxu0 0.0
      %834 = vmatprep.subr.mxu0 0.0
      %835 = vmatpush1.msra.mxu0 0.0
      %836 = vmatprep.subr.mxu0 0.0
      %837 = vmatpush1.msra.mxu0 0.0
      %838 = vmatprep.subr.mxu0 0.0
      %839 = vmatpush1.msra.mxu0 0.0
      %840 = vmatprep.subr.mxu0 0.0
      %841 = vmatpush1.msra.mxu0 0.0
      %842 = vmatprep.subr.mxu0 0.0
      %843 = vmatpush1.msra.mxu0 0.0
      %844 = vmatprep.subr.mxu0 0.0
      %845 = vmatpush1.msra.mxu0 0.0
      %846 = vmatprep.subr.mxu0 0.0
      %847 = vmatpush1.msra.mxu0 0.0
      %848 = vmatprep.subr.mxu0 0.0
      %849 = vmatpush1.msra.mxu0 0.0
      %850 = vmatprep.subr.mxu0 0.0
      %851 = vmatpush1.msra.mxu0 0.0
      %852 = vmatprep.subr.mxu0 0.0
      %853 = vmatpush1.msra.mxu0 0.0
      %854 = vmatprep.subr.mxu0 0.0
      %855 = vmatpush1.msra.mxu0 0.0
      %856 = vmatprep.subr.mxu0 0.0
      %857 = vmatpush1.msra.mxu0 0.0
      %858 = vmatprep.subr.mxu0 0.0
      %859 = vmatpush1.msra.mxu0 %v257
      %860 = vmatprep.subr.mxu0 0.0
      %861 = vmatpush1.msra.mxu0 %v256
      %862 = vmatprep.subr.mxu0 0.0
      %863 = vmatpush2.msra.mxu0 0.0
      %864 = vmatprep.subr.mxu0 0.0
      %865 = vmatpush2.msra.mxu0 0.0
      %866 = vmatprep.subr.mxu0 0.0
      %867 = vmatpush2.msra.mxu0 0.0
      %868 = vmatprep.subr.mxu0 0.0
      %869 = vmatpush2.msra.mxu0 0.0
      %870 = vmatprep.subr.mxu0 0.0
      %871 = vmatpush2.msra.mxu0 0.0
      %872 = vmatprep.subr.mxu0 0.0
      %873 = vmatpush2.msra.mxu0 0.0
      %874 = vmatprep.subr.mxu0 0.0
      %875 = vmatpush2.msra.mxu0 0.0
      %876 = vmatprep.subr.mxu0 0.0
      %877 = vmatpush2.msra.mxu0 0.0
      %878 = vmatprep.subr.mxu0 0.0
      %879 = vmatpush2.msra.mxu0 0.0
      %880 = vmatprep.subr.mxu0 0.0
      %881 = vmatpush2.msra.mxu0 0.0
      %882 = vmatprep.subr.mxu0 0.0
      %883 = vmatpush2.msra.mxu0 0.0
      %884 = vmatprep.subr.mxu0 0.0
      %885 = vmatpush2.msra.mxu0 0.0
      %886 = vmatprep.subr.mxu0 0.0
      %887 = vmatpush2.msra.mxu0 0.0
      %888 = vmatprep.subr.mxu0 0.0
      %889 = vmatpush2.msra.mxu0 0.0
      %890 = vmatprep.subr.mxu0 0.0
      %891 = vmatpush2.msra.mxu0 0.0
      %892 = vmatprep.subr.mxu0 0.0
      %893 = vmatpush2.msra.mxu0 0.0
      %894 = vmatprep.mubr.f32.mxu0 0.0
      %895 = vmatmul.mubr.f32.gmra.mxu0 %v828
      %v896 = vpop.f32.mrf.mxu0
      %v897 = vadd.f32 %v263, %v896
      %v898 = vpop.f32.mrf.mxu0
      %899 = vdwg.mxu0
      %s900 = sadd.s32 %s287, 24
      %s901 = scalar_lea.vmem [#allocation2], %s900
      %902 = vst [vmem:[%s901] sm:$0xff] %v897
      %s903 = sadd.s32 %s273, 32
      %s904 = scalar_lea.vmem [#allocation2], %s903
      %v905 = vld [vmem:[%s904] sm:$0xff]
      %906 = vmatprep.subr.mxu0 0.0
      %907 = vmatpush1.msra.mxu0 %v255
      %908 = vmatprep.subr.mxu0 0.0
      %909 = vmatpush1.msra.mxu0 %v254
      %910 = vmatprep.subr.mxu0 0.0
      %911 = vmatpush1.msra.mxu0 %v253
      %912 = vmatprep.subr.mxu0 0.0
      %913 = vmatpush1.msra.mxu0 %v252
      %914 = vmatprep.subr.mxu0 0.0
      %915 = vmatpush1.msra.mxu0 %v251
      %916 = vmatprep.subr.mxu0 0.0
      %917 = vmatpush1.msra.mxu0 %v250
      %918 = vmatprep.subr.mxu0 0.0
      %919 = vmatpush1.msra.mxu0 %v249
      %920 = vmatprep.subr.mxu0 0.0
      %921 = vmatpush1.msra.mxu0 %v248
      %922 = vmatprep.subr.mxu0 0.0
      %923 = vmatpush1.msra.mxu0 %v247
      %924 = vmatprep.subr.mxu0 0.0
      %925 = vmatpush1.msra.mxu0 %v246
      %926 = vmatprep.subr.mxu0 0.0
      %927 = vmatpush1.msra.mxu0 %v245
      %928 = vmatprep.subr.mxu0 0.0
      %929 = vmatpush1.msra.mxu0 %v244
      %930 = vmatprep.subr.mxu0 0.0
      %931 = vmatpush1.msra.mxu0 %v243
      %932 = vmatprep.subr.mxu0 0.0
      %933 = vmatpush1.msra.mxu0 %v242
      %934 = vmatprep.subr.mxu0 0.0
      %935 = vmatpush1.msra.mxu0 %v241
      %936 = vmatprep.subr.mxu0 0.0
      %937 = vmatpush1.msra.mxu0 %v240
      %938 = vmatprep.subr.mxu0 0.0
      %939 = vmatpush2.msra.mxu0 0.0
      %940 = vmatprep.subr.mxu0 0.0
      %941 = vmatpush2.msra.mxu0 0.0
      %942 = vmatprep.subr.mxu0 0.0
      %943 = vmatpush2.msra.mxu0 0.0
      %944 = vmatprep.subr.mxu0 0.0
      %945 = vmatpush2.msra.mxu0 0.0
      %946 = vmatprep.subr.mxu0 0.0
      %947 = vmatpush2.msra.mxu0 0.0
      %948 = vmatprep.subr.mxu0 0.0
      %949 = vmatpush2.msra.mxu0 0.0
      %950 = vmatprep.subr.mxu0 0.0
      %951 = vmatpush2.msra.mxu0 0.0
      %952 = vmatprep.subr.mxu0 0.0
      %953 = vmatpush2.msra.mxu0 0.0
      %954 = vmatprep.subr.mxu0 0.0
      %955 = vmatpush2.msra.mxu0 0.0
      %956 = vmatprep.subr.mxu0 0.0
      %957 = vmatpush2.msra.mxu0 0.0
      %958 = vmatprep.subr.mxu0 0.0
      %959 = vmatpush2.msra.mxu0 0.0
      %960 = vmatprep.subr.mxu0 0.0
      %961 = vmatpush2.msra.mxu0 0.0
      %962 = vmatprep.subr.mxu0 0.0
      %963 = vmatpush2.msra.mxu0 0.0
      %964 = vmatprep.subr.mxu0 0.0
      %965 = vmatpush2.msra.mxu0 0.0
      %966 = vmatprep.subr.mxu0 0.0
      %967 = vmatpush2.msra.mxu0 0.0
      %968 = vmatprep.subr.mxu0 0.0
      %969 = vmatpush2.msra.mxu0 0.0
      %970 = vmatprep.mubr.f32.mxu0 0.0
      %971 = vmatmul.mubr.f32.gmra.mxu0 %v824
      %v972 = vpop.f32.mrf.mxu0
      %v973 = vadd.f32 0.0, %v972
      %v974 = vpop.f32.mrf.mxu0
      %975 = vdwg.mxu0
      %v976 = vadd.f32 %v905, %v973
      %v977 = vtanh.pop %v976
      %s978 = scalar_lea.vmem %s74, 32
      %v979 = vld [vmem:[%s978] sm:$0xff]
      %v981 = vsel %vm368, %v979, 0
      %983 = vmatprep.subr.mxu0 0.0
      %984 = vmatpush1.msra.mxu0 0.0
      %985 = vmatprep.subr.mxu0 0.0
      %986 = vmatpush1.msra.mxu0 0.0
      %987 = vmatprep.subr.mxu0 0.0
      %988 = vmatpush1.msra.mxu0 0.0
      %989 = vmatprep.subr.mxu0 0.0
      %990 = vmatpush1.msra.mxu0 0.0
      %991 = vmatprep.subr.mxu0 0.0
      %992 = vmatpush1.msra.mxu0 0.0
      %993 = vmatprep.subr.mxu0 0.0
      %994 = vmatpush1.msra.mxu0 0.0
      %995 = vmatprep.subr.mxu0 0.0
      %996 = vmatpush1.msra.mxu0 0.0
      %997 = vmatprep.subr.mxu0 0.0
      %998 = vmatpush1.msra.mxu0 0.0
      %999 = vmatprep.subr.mxu0 0.0
      %1000 = vmatpush1.msra.mxu0 0.0
      %1001 = vmatprep.subr.mxu0 0.0
      %1002 = vmatpush1.msra.mxu0 0.0
      %1003 = vmatprep.subr.mxu0 0.0
      %1004 = vmatpush1.msra.mxu0 0.0
      %1005 = vmatprep.subr.mxu0 0.0
      %1006 = vmatpush1.msra.mxu0 0.0
      %1007 = vmatprep.subr.mxu0 0.0
      %1008 = vmatpush1.msra.mxu0 0.0
      %1009 = vmatprep.subr.mxu0 0.0
      %1010 = vmatpush1.msra.mxu0 0.0
      %1011 = vmatprep.subr.mxu0 0.0
      %1012 = vmatpush1.msra.mxu0 %v257
      %1013 = vmatprep.subr.mxu0 0.0
      %1014 = vmatpush1.msra.mxu0 %v256
      %1015 = vmatprep.subr.mxu0 0.0
      %1016 = vmatpush2.msra.mxu0 0.0
      %1017 = vmatprep.subr.mxu0 0.0
      %1018 = vmatpush2.msra.mxu0 0.0
      %1019 = vmatprep.subr.mxu0 0.0
      %1020 = vmatpush2.msra.mxu0 0.0
      %1021 = vmatprep.subr.mxu0 0.0
      %1022 = vmatpush2.msra.mxu0 0.0
      %1023 = vmatprep.subr.mxu0 0.0
      %1024 = vmatpush2.msra.mxu0 0.0
      %1025 = vmatprep.subr.mxu0 0.0
      %1026 = vmatpush2.msra.mxu0 0.0
      %1027 = vmatprep.subr.mxu0 0.0
      %1028 = vmatpush2.msra.mxu0 0.0
      %1029 = vmatprep.subr.mxu0 0.0
      %1030 = vmatpush2.msra.mxu0 0.0
      %1031 = vmatprep.subr.mxu0 0.0
      %1032 = vmatpush2.msra.mxu0 0.0
      %1033 = vmatprep.subr.mxu0 0.0
      %1034 = vmatpush2.msra.mxu0 0.0
      %1035 = vmatprep.subr.mxu0 0.0
      %1036 = vmatpush2.msra.mxu0 0.0
      %1037 = vmatprep.subr.mxu0 0.0
      %1038 = vmatpush2.msra.mxu0 0.0
      %1039 = vmatprep.subr.mxu0 0.0
      %1040 = vmatpush2.msra.mxu0 0.0
      %1041 = vmatprep.subr.mxu0 0.0
      %1042 = vmatpush2.msra.mxu0 0.0
      %1043 = vmatprep.subr.mxu0 0.0
      %1044 = vmatpush2.msra.mxu0 0.0
      %1045 = vmatprep.subr.mxu0 0.0
      %1046 = vmatpush2.msra.mxu0 0.0
      %1047 = vmatprep.mubr.f32.mxu0 0.0
      %1048 = vmatmul.mubr.f32.gmra.mxu0 %v981
      %v1049 = vpop.f32.mrf.mxu0
      %v1050 = vadd.f32 %v263, %v1049
      %v1051 = vpop.f32.mrf.mxu0
      %1052 = vdwg.mxu0
      %s1053 = sadd.s32 %s287, 32
      %s1054 = scalar_lea.vmem [#allocation2], %s1053
      %1055 = vst [vmem:[%s1054] sm:$0xff] %v1050
      %s1056 = sadd.s32 %s273, 40
      %s1057 = scalar_lea.vmem [#allocation2], %s1056
      %v1058 = vld [vmem:[%s1057] sm:$0xff]
      %1059 = vmatprep.subr.mxu0 0.0
      %1060 = vmatpush1.msra.mxu0 %v255
      %1061 = vmatprep.subr.mxu0 0.0
      %1062 = vmatpush1.msra.mxu0 %v254
      %1063 = vmatprep.subr.mxu0 0.0
      %1064 = vmatpush1.msra.mxu0 %v253
      %1065 = vmatprep.subr.mxu0 0.0
      %1066 = vmatpush1.msra.mxu0 %v252
      %1067 = vmatprep.subr.mxu0 0.0
      %1068 = vmatpush1.msra.mxu0 %v251
      %1069 = vmatprep.subr.mxu0 0.0
      %1070 = vmatpush1.msra.mxu0 %v250
      %1071 = vmatprep.subr.mxu0 0.0
      %1072 = vmatpush1.msra.mxu0 %v249
      %1073 = vmatprep.subr.mxu0 0.0
      %1074 = vmatpush1.msra.mxu0 %v248
      %1075 = vmatprep.subr.mxu0 0.0
      %1076 = vmatpush1.msra.mxu0 %v247
      %1077 = vmatprep.subr.mxu0 0.0
      %1078 = vmatpush1.msra.mxu0 %v246
      %1079 = vmatprep.subr.mxu0 0.0
      %1080 = vmatpush1.msra.mxu0 %v245
      %1081 = vmatprep.subr.mxu0 0.0
      %1082 = vmatpush1.msra.mxu0 %v244
      %1083 = vmatprep.subr.mxu0 0.0
      %1084 = vmatpush1.msra.mxu0 %v243
      %1085 = vmatprep.subr.mxu0 0.0
      %1086 = vmatpush1.msra.mxu0 %v242
      %1087 = vmatprep.subr.mxu0 0.0
      %1088 = vmatpush1.msra.mxu0 %v241
      %1089 = vmatprep.subr.mxu0 0.0
      %1090 = vmatpush1.msra.mxu0 %v240
      %1091 = vmatprep.subr.mxu0 0.0
      %1092 = vmatpush2.msra.mxu0 0.0
      %1093 = vmatprep.subr.mxu0 0.0
      %1094 = vmatpush2.msra.mxu0 0.0
      %1095 = vmatprep.subr.mxu0 0.0
      %1096 = vmatpush2.msra.mxu0 0.0
      %1097 = vmatprep.subr.mxu0 0.0
      %1098 = vmatpush2.msra.mxu0 0.0
      %1099 = vmatprep.subr.mxu0 0.0
      %1100 = vmatpush2.msra.mxu0 0.0
      %1101 = vmatprep.subr.mxu0 0.0
      %1102 = vmatpush2.msra.mxu0 0.0
      %1103 = vmatprep.subr.mxu0 0.0
      %1104 = vmatpush2.msra.mxu0 0.0
      %1105 = vmatprep.subr.mxu0 0.0
      %1106 = vmatpush2.msra.mxu0 0.0
      %1107 = vmatprep.subr.mxu0 0.0
      %1108 = vmatpush2.msra.mxu0 0.0
      %1109 = vmatprep.subr.mxu0 0.0
      %1110 = vmatpush2.msra.mxu0 0.0
      %1111 = vmatprep.subr.mxu0 0.0
      %1112 = vmatpush2.msra.mxu0 0.0
      %1113 = vmatprep.subr.mxu0 0.0
      %1114 = vmatpush2.msra.mxu0 0.0
      %1115 = vmatprep.subr.mxu0 0.0
      %1116 = vmatpush2.msra.mxu0 0.0
      %1117 = vmatprep.subr.mxu0 0.0
      %1118 = vmatpush2.msra.mxu0 0.0
      %1119 = vmatprep.subr.mxu0 0.0
      %1120 = vmatpush2.msra.mxu0 0.0
      %1121 = vmatprep.subr.mxu0 0.0
      %1122 = vmatpush2.msra.mxu0 0.0
      %1123 = vmatprep.mubr.f32.mxu0 0.0
      %1124 = vmatmul.mubr.f32.gmra.mxu0 %v977
      %v1125 = vpop.f32.mrf.mxu0
      %v1126 = vadd.f32 0.0, %v1125
      %v1127 = vpop.f32.mrf.mxu0
      %1128 = vdwg.mxu0
      %v1129 = vadd.f32 %v1058, %v1126
      %v1130 = vtanh.pop %v1129
      %s1131 = scalar_lea.vmem %s74, 40
      %v1132 = vld [vmem:[%s1131] sm:$0xff]
      %v1134 = vsel %vm368, %v1132, 0
      %1136 = vmatprep.subr.mxu0 0.0
      %1137 = vmatpush1.msra.mxu0 0.0
      %1138 = vmatprep.subr.mxu0 0.0
      %1139 = vmatpush1.msra.mxu0 0.0
      %1140 = vmatprep.subr.mxu0 0.0
      %1141 = vmatpush1.msra.mxu0 0.0
      %1142 = vmatprep.subr.mxu0 0.0
      %1143 = vmatpush1.msra.mxu0 0.0
      %1144 = vmatprep.subr.mxu0 0.0
      %1145 = vmatpush1.msra.mxu0 0.0
      %1146 = vmatprep.subr.mxu0 0.0
      %1147 = vmatpush1.msra.mxu0 0.0
      %1148 = vmatprep.subr.mxu0 0.0
      %1149 = vmatpush1.msra.mxu0 0.0
      %1150 = vmatprep.subr.mxu0 0.0
      %1151 = vmatpush1.msra.mxu0 0.0
      %1152 = vmatprep.subr.mxu0 0.0
      %1153 = vmatpush1.msra.mxu0 0.0
      %1154 = vmatprep.subr.mxu0 0.0
      %1155 = vmatpush1.msra.mxu0 0.0
      %1156 = vmatprep.subr.mxu0 0.0
      %1157 = vmatpush1.msra.mxu0 0.0
      %1158 = vmatprep.subr.mxu0 0.0
      %1159 = vmatpush1.msra.mxu0 0.0
      %1160 = vmatprep.subr.mxu0 0.0
      %1161 = vmatpush1.msra.mxu0 0.0
      %1162 = vmatprep.subr.mxu0 0.0
      %1163 = vmatpush1.msra.mxu0 0.0
      %1164 = vmatprep.subr.mxu0 0.0
      %1165 = vmatpush1.msra.mxu0 %v257
      %1166 = vmatprep.subr.mxu0 0.0
      %1167 = vmatpush1.msra.mxu0 %v256
      %1168 = vmatprep.subr.mxu0 0.0
      %1169 = vmatpush2.msra.mxu0 0.0
      %1170 = vmatprep.subr.mxu0 0.0
      %1171 = vmatpush2.msra.mxu0 0.0
      %1172 = vmatprep.subr.mxu0 0.0
      %1173 = vmatpush2.msra.mxu0 0.0
      %1174 = vmatprep.subr.mxu0 0.0
      %1175 = vmatpush2.msra.mxu0 0.0
      %1176 = vmatprep.subr.mxu0 0.0
      %1177 = vmatpush2.msra.mxu0 0.0
      %1178 = vmatprep.subr.mxu0 0.0
      %1179 = vmatpush2.msra.mxu0 0.0
      %1180 = vmatprep.subr.mxu0 0.0
      %1181 = vmatpush2.msra.mxu0 0.0
      %1182 = vmatprep.subr.mxu0 0.0
      %1183 = vmatpush2.msra.mxu0 0.0
      %1184 = vmatprep.subr.mxu0 0.0
      %1185 = vmatpush2.msra.mxu0 0.0
      %1186 = vmatprep.subr.mxu0 0.0
      %1187 = vmatpush2.msra.mxu0 0.0
      %1188 = vmatprep.subr.mxu0 0.0
      %1189 = vmatpush2.msra.mxu0 0.0
      %1190 = vmatprep.subr.mxu0 0.0
      %1191 = vmatpush2.msra.mxu0 0.0
      %1192 = vmatprep.subr.mxu0 0.0
      %1193 = vmatpush2.msra.mxu0 0.0
      %1194 = vmatprep.subr.mxu0 0.0
      %1195 = vmatpush2.msra.mxu0 0.0
      %1196 = vmatprep.subr.mxu0 0.0
      %1197 = vmatpush2.msra.mxu0 0.0
      %1198 = vmatprep.subr.mxu0 0.0
      %1199 = vmatpush2.msra.mxu0 0.0
      %1200 = vmatprep.mubr.f32.mxu0 0.0
      %1201 = vmatmul.mubr.f32.gmra.mxu0 %v1134
      %v1202 = vpop.f32.mrf.mxu0
      %v1203 = vadd.f32 %v263, %v1202
      %v1204 = vpop.f32.mrf.mxu0
      %1205 = vdwg.mxu0
      %s1206 = sadd.s32 %s287, 40
      %s1207 = scalar_lea.vmem [#allocation2], %s1206
      %1208 = vst [vmem:[%s1207] sm:$0xff] %v1203
      %s1209 = sadd.s32 %s273, 48
      %s1210 = scalar_lea.vmem [#allocation2], %s1209
      %v1211 = vld [vmem:[%s1210] sm:$0xff]
      %1212 = vmatprep.subr.mxu0 0.0
      %1213 = vmatpush1.msra.mxu0 %v255
      %1214 = vmatprep.subr.mxu0 0.0
      %1215 = vmatpush1.msra.mxu0 %v254
      %1216 = vmatprep.subr.mxu0 0.0
      %1217 = vmatpush1.msra.mxu0 %v253
      %1218 = vmatprep.subr.mxu0 0.0
      %1219 = vmatpush1.msra.mxu0 %v252
      %1220 = vmatprep.subr.mxu0 0.0
      %1221 = vmatpush1.msra.mxu0 %v251
      %1222 = vmatprep.subr.mxu0 0.0
      %1223 = vmatpush1.msra.mxu0 %v250
      %1224 = vmatprep.subr.mxu0 0.0
      %1225 = vmatpush1.msra.mxu0 %v249
      %1226 = vmatprep.subr.mxu0 0.0
      %1227 = vmatpush1.msra.mxu0 %v248
      %1228 = vmatprep.subr.mxu0 0.0
      %1229 = vmatpush1.msra.mxu0 %v247
      %1230 = vmatprep.subr.mxu0 0.0
      %1231 = vmatpush1.msra.mxu0 %v246
      %1232 = vmatprep.subr.mxu0 0.0
      %1233 = vmatpush1.msra.mxu0 %v245
      %1234 = vmatprep.subr.mxu0 0.0
      %1235 = vmatpush1.msra.mxu0 %v244
      %1236 = vmatprep.subr.mxu0 0.0
      %1237 = vmatpush1.msra.mxu0 %v243
      %1238 = vmatprep.subr.mxu0 0.0
      %1239 = vmatpush1.msra.mxu0 %v242
      %1240 = vmatprep.subr.mxu0 0.0
      %1241 = vmatpush1.msra.mxu0 %v241
      %1242 = vmatprep.subr.mxu0 0.0
      %1243 = vmatpush1.msra.mxu0 %v240
      %1244 = vmatprep.subr.mxu0 0.0
      %1245 = vmatpush2.msra.mxu0 0.0
      %1246 = vmatprep.subr.mxu0 0.0
      %1247 = vmatpush2.msra.mxu0 0.0
      %1248 = vmatprep.subr.mxu0 0.0
      %1249 = vmatpush2.msra.mxu0 0.0
      %1250 = vmatprep.subr.mxu0 0.0
      %1251 = vmatpush2.msra.mxu0 0.0
      %1252 = vmatprep.subr.mxu0 0.0
      %1253 = vmatpush2.msra.mxu0 0.0
      %1254 = vmatprep.subr.mxu0 0.0
      %1255 = vmatpush2.msra.mxu0 0.0
      %1256 = vmatprep.subr.mxu0 0.0
      %1257 = vmatpush2.msra.mxu0 0.0
      %1258 = vmatprep.subr.mxu0 0.0
      %1259 = vmatpush2.msra.mxu0 0.0
      %1260 = vmatprep.subr.mxu0 0.0
      %1261 = vmatpush2.msra.mxu0 0.0
      %1262 = vmatprep.subr.mxu0 0.0
      %1263 = vmatpush2.msra.mxu0 0.0
      %1264 = vmatprep.subr.mxu0 0.0
      %1265 = vmatpush2.msra.mxu0 0.0
      %1266 = vmatprep.subr.mxu0 0.0
      %1267 = vmatpush2.msra.mxu0 0.0
      %1268 = vmatprep.subr.mxu0 0.0
      %1269 = vmatpush2.msra.mxu0 0.0
      %1270 = vmatprep.subr.mxu0 0.0
      %1271 = vmatpush2.msra.mxu0 0.0
      %1272 = vmatprep.subr.mxu0 0.0
      %1273 = vmatpush2.msra.mxu0 0.0
      %1274 = vmatprep.subr.mxu0 0.0
      %1275 = vmatpush2.msra.mxu0 0.0
      %1276 = vmatprep.mubr.f32.mxu0 0.0
      %1277 = vmatmul.mubr.f32.gmra.mxu0 %v1130
      %v1278 = vpop.f32.mrf.mxu0
      %v1279 = vadd.f32 0.0, %v1278
      %v1280 = vpop.f32.mrf.mxu0
      %1281 = vdwg.mxu0
      %v1282 = vadd.f32 %v1211, %v1279
      %v1283 = vtanh.pop %v1282
      %s1284 = scalar_lea.vmem %s74, 48
      %v1285 = vld [vmem:[%s1284] sm:$0xff]
      %v1287 = vsel %vm368, %v1285, 0
      %1289 = vmatprep.subr.mxu0 0.0
      %1290 = vmatpush1.msra.mxu0 0.0
      %1291 = vmatprep.subr.mxu0 0.0
      %1292 = vmatpush1.msra.mxu0 0.0
      %1293 = vmatprep.subr.mxu0 0.0
      %1294 = vmatpush1.msra.mxu0 0.0
      %1295 = vmatprep.subr.mxu0 0.0
      %1296 = vmatpush1.msra.mxu0 0.0
      %1297 = vmatprep.subr.mxu0 0.0
      %1298 = vmatpush1.msra.mxu0 0.0
      %1299 = vmatprep.subr.mxu0 0.0
      %1300 = vmatpush1.msra.mxu0 0.0
      %1301 = vmatprep.subr.mxu0 0.0
      %1302 = vmatpush1.msra.mxu0 0.0
      %1303 = vmatprep.subr.mxu0 0.0
      %1304 = vmatpush1.msra.mxu0 0.0
      %1305 = vmatprep.subr.mxu0 0.0
      %1306 = vmatpush1.msra.mxu0 0.0
      %1307 = vmatprep.subr.mxu0 0.0
      %1308 = vmatpush1.msra.mxu0 0.0
      %1309 = vmatprep.subr.mxu0 0.0
      %1310 = vmatpush1.msra.mxu0 0.0
      %1311 = vmatprep.subr.mxu0 0.0
      %1312 = vmatpush1.msra.mxu0 0.0
      %1313 = vmatprep.subr.mxu0 0.0
      %1314 = vmatpush1.msra.mxu0 0.0
      %1315 = vmatprep.subr.mxu0 0.0
      %1316 = vmatpush1.msra.mxu0 0.0
      %1317 = vmatprep.subr.mxu0 0.0
      %1318 = vmatpush1.msra.mxu0 %v257
      %1319 = vmatprep.subr.mxu0 0.0
      %1320 = vmatpush1.msra.mxu0 %v256
      %1321 = vmatprep.subr.mxu0 0.0
      %1322 = vmatpush2.msra.mxu0 0.0
      %1323 = vmatprep.subr.mxu0 0.0
      %1324 = vmatpush2.msra.mxu0 0.0
      %1325 = vmatprep.subr.mxu0 0.0
      %1326 = vmatpush2.msra.mxu0 0.0
      %1327 = vmatprep.subr.mxu0 0.0
      %1328 = vmatpush2.msra.mxu0 0.0
      %1329 = vmatprep.subr.mxu0 0.0
      %1330 = vmatpush2.msra.mxu0 0.0
      %1331 = vmatprep.subr.mxu0 0.0
      %1332 = vmatpush2.msra.mxu0 0.0
      %1333 = vmatprep.subr.mxu0 0.0
      %1334 = vmatpush2.msra.mxu0 0.0
      %1335 = vmatprep.subr.mxu0 0.0
      %1336 = vmatpush2.msra.mxu0 0.0
      %1337 = vmatprep.subr.mxu0 0.0
      %1338 = vmatpush2.msra.mxu0 0.0
      %1339 = vmatprep.subr.mxu0 0.0
      %1340 = vmatpush2.msra.mxu0 0.0
      %1341 = vmatprep.subr.mxu0 0.0
      %1342 = vmatpush2.msra.mxu0 0.0
      %1343 = vmatprep.subr.mxu0 0.0
      %1344 = vmatpush2.msra.mxu0 0.0
      %1345 = vmatprep.subr.mxu0 0.0
      %1346 = vmatpush2.msra.mxu0 0.0
      %1347 = vmatprep.subr.mxu0 0.0
      %1348 = vmatpush2.msra.mxu0 0.0
      %1349 = vmatprep.subr.mxu0 0.0
      %1350 = vmatpush2.msra.mxu0 0.0
      %1351 = vmatprep.subr.mxu0 0.0
      %1352 = vmatpush2.msra.mxu0 0.0
      %1353 = vmatprep.mubr.f32.mxu0 0.0
      %1354 = vmatmul.mubr.f32.gmra.mxu0 %v1287
      %v1355 = vpop.f32.mrf.mxu0
      %v1356 = vadd.f32 %v263, %v1355
      %v1357 = vpop.f32.mrf.mxu0
      %1358 = vdwg.mxu0
      %s1359 = sadd.s32 %s287, 48
      %s1360 = scalar_lea.vmem [#allocation2], %s1359
      %1361 = vst [vmem:[%s1360] sm:$0xff] %v1356
      %s1362 = sadd.s32 %s273, 56
      %s1363 = scalar_lea.vmem [#allocation2], %s1362
      %v1364 = vld [vmem:[%s1363] sm:$0xff]
      %1365 = vmatprep.subr.mxu0 0.0
      %1366 = vmatpush1.msra.mxu0 %v255
      %1367 = vmatprep.subr.mxu0 0.0
      %1368 = vmatpush1.msra.mxu0 %v254
      %1369 = vmatprep.subr.mxu0 0.0
      %1370 = vmatpush1.msra.mxu0 %v253
      %1371 = vmatprep.subr.mxu0 0.0
      %1372 = vmatpush1.msra.mxu0 %v252
      %1373 = vmatprep.subr.mxu0 0.0
      %1374 = vmatpush1.msra.mxu0 %v251
      %1375 = vmatprep.subr.mxu0 0.0
      %1376 = vmatpush1.msra.mxu0 %v250
      %1377 = vmatprep.subr.mxu0 0.0
      %1378 = vmatpush1.msra.mxu0 %v249
      %1379 = vmatprep.subr.mxu0 0.0
      %1380 = vmatpush1.msra.mxu0 %v248
      %1381 = vmatprep.subr.mxu0 0.0
      %1382 = vmatpush1.msra.mxu0 %v247
      %1383 = vmatprep.subr.mxu0 0.0
      %1384 = vmatpush1.msra.mxu0 %v246
      %1385 = vmatprep.subr.mxu0 0.0
      %1386 = vmatpush1.msra.mxu0 %v245
      %1387 = vmatprep.subr.mxu0 0.0
      %1388 = vmatpush1.msra.mxu0 %v244
      %1389 = vmatprep.subr.mxu0 0.0
      %1390 = vmatpush1.msra.mxu0 %v243
      %1391 = vmatprep.subr.mxu0 0.0
      %1392 = vmatpush1.msra.mxu0 %v242
      %1393 = vmatprep.subr.mxu0 0.0
      %1394 = vmatpush1.msra.mxu0 %v241
      %1395 = vmatprep.subr.mxu0 0.0
      %1396 = vmatpush1.msra.mxu0 %v240
      %1397 = vmatprep.subr.mxu0 0.0
      %1398 = vmatpush2.msra.mxu0 0.0
      %1399 = vmatprep.subr.mxu0 0.0
      %1400 = vmatpush2.msra.mxu0 0.0
      %1401 = vmatprep.subr.mxu0 0.0
      %1402 = vmatpush2.msra.mxu0 0.0
      %1403 = vmatprep.subr.mxu0 0.0
      %1404 = vmatpush2.msra.mxu0 0.0
      %1405 = vmatprep.subr.mxu0 0.0
      %1406 = vmatpush2.msra.mxu0 0.0
      %1407 = vmatprep.subr.mxu0 0.0
      %1408 = vmatpush2.msra.mxu0 0.0
      %1409 = vmatprep.subr.mxu0 0.0
      %1410 = vmatpush2.msra.mxu0 0.0
      %1411 = vmatprep.subr.mxu0 0.0
      %1412 = vmatpush2.msra.mxu0 0.0
      %1413 = vmatprep.subr.mxu0 0.0
      %1414 = vmatpush2.msra.mxu0 0.0
      %1415 = vmatprep.subr.mxu0 0.0
      %1416 = vmatpush2.msra.mxu0 0.0
      %1417 = vmatprep.subr.mxu0 0.0
      %1418 = vmatpush2.msra.mxu0 0.0
      %1419 = vmatprep.subr.mxu0 0.0
      %1420 = vmatpush2.msra.mxu0 0.0
      %1421 = vmatprep.subr.mxu0 0.0
      %1422 = vmatpush2.msra.mxu0 0.0
      %1423 = vmatprep.subr.mxu0 0.0
      %1424 = vmatpush2.msra.mxu0 0.0
      %1425 = vmatprep.subr.mxu0 0.0
      %1426 = vmatpush2.msra.mxu0 0.0
      %1427 = vmatprep.subr.mxu0 0.0
      %1428 = vmatpush2.msra.mxu0 0.0
      %1429 = vmatprep.mubr.f32.mxu0 0.0
      %1430 = vmatmul.mubr.f32.gmra.mxu0 %v1283
      %v1431 = vpop.f32.mrf.mxu0
      %v1432 = vadd.f32 0.0, %v1431
      %v1433 = vpop.f32.mrf.mxu0
      %1434 = vdwg.mxu0
      %v1435 = vadd.f32 %v1364, %v1432
      %v1436 = vtanh.pop %v1435
      %s1437 = scalar_lea.vmem %s74, 56
      %v1438 = vld [vmem:[%s1437] sm:$0xff]
      %v1440 = vsel %vm368, %v1438, 0
      %1442 = vmatprep.subr.mxu0 0.0
      %1443 = vmatpush1.msra.mxu0 0.0
      %1444 = vmatprep.subr.mxu0 0.0
      %1445 = vmatpush1.msra.mxu0 0.0
      %1446 = vmatprep.subr.mxu0 0.0
      %1447 = vmatpush1.msra.mxu0 0.0
      %1448 = vmatprep.subr.mxu0 0.0
      %1449 = vmatpush1.msra.mxu0 0.0
      %1450 = vmatprep.subr.mxu0 0.0
      %1451 = vmatpush1.msra.mxu0 0.0
      %1452 = vmatprep.subr.mxu0 0.0
      %1453 = vmatpush1.msra.mxu0 0.0
      %1454 = vmatprep.subr.mxu0 0.0
      %1455 = vmatpush1.msra.mxu0 0.0
      %1456 = vmatprep.subr.mxu0 0.0
      %1457 = vmatpush1.msra.mxu0 0.0
      %1458 = vmatprep.subr.mxu0 0.0
      %1459 = vmatpush1.msra.mxu0 0.0
      %1460 = vmatprep.subr.mxu0 0.0
      %1461 = vmatpush1.msra.mxu0 0.0
      %1462 = vmatprep.subr.mxu0 0.0
      %1463 = vmatpush1.msra.mxu0 0.0
      %1464 = vmatprep.subr.mxu0 0.0
      %1465 = vmatpush1.msra.mxu0 0.0
      %1466 = vmatprep.subr.mxu0 0.0
      %1467 = vmatpush1.msra.mxu0 0.0
      %1468 = vmatprep.subr.mxu0 0.0
      %1469 = vmatpush1.msra.mxu0 0.0
      %1470 = vmatprep.subr.mxu0 0.0
      %1471 = vmatpush1.msra.mxu0 %v257
      %1472 = vmatprep.subr.mxu0 0.0
      %1473 = vmatpush1.msra.mxu0 %v256
      %1474 = vmatprep.subr.mxu0 0.0
      %1475 = vmatpush2.msra.mxu0 0.0
      %1476 = vmatprep.subr.mxu0 0.0
      %1477 = vmatpush2.msra.mxu0 0.0
      %1478 = vmatprep.subr.mxu0 0.0
      %1479 = vmatpush2.msra.mxu0 0.0
      %1480 = vmatprep.subr.mxu0 0.0
      %1481 = vmatpush2.msra.mxu0 0.0
      %1482 = vmatprep.subr.mxu0 0.0
      %1483 = vmatpush2.msra.mxu0 0.0
      %1484 = vmatprep.subr.mxu0 0.0
      %1485 = vmatpush2.msra.mxu0 0.0
      %1486 = vmatprep.subr.mxu0 0.0
      %1487 = vmatpush2.msra.mxu0 0.0
      %1488 = vmatprep.subr.mxu0 0.0
      %1489 = vmatpush2.msra.mxu0 0.0
      %1490 = vmatprep.subr.mxu0 0.0
      %1491 = vmatpush2.msra.mxu0 0.0
      %1492 = vmatprep.subr.mxu0 0.0
      %1493 = vmatpush2.msra.mxu0 0.0
      %1494 = vmatprep.subr.mxu0 0.0
      %1495 = vmatpush2.msra.mxu0 0.0
      %1496 = vmatprep.subr.mxu0 0.0
      %1497 = vmatpush2.msra.mxu0 0.0
      %1498 = vmatprep.subr.mxu0 0.0
      %1499 = vmatpush2.msra.mxu0 0.0
      %1500 = vmatprep.subr.mxu0 0.0
      %1501 = vmatpush2.msra.mxu0 0.0
      %1502 = vmatprep.subr.mxu0 0.0
      %1503 = vmatpush2.msra.mxu0 0.0
      %1504 = vmatprep.subr.mxu0 0.0
      %1505 = vmatpush2.msra.mxu0 0.0
      %1506 = vmatprep.mubr.f32.mxu0 0.0
      %1507 = vmatmul.mubr.f32.gmra.mxu0 %v1440
      %v1508 = vpop.f32.mrf.mxu0
      %v1509 = vadd.f32 %v263, %v1508
      %v1510 = vpop.f32.mrf.mxu0
      %1511 = vdwg.mxu0
      %s1512 = sadd.s32 %s287, 56
      %s1513 = scalar_lea.vmem [#allocation2], %s1512
      %1514 = vst [vmem:[%s1513] sm:$0xff] %v1509
      %1515 = vst [vmem:[#allocation3] sm:$0xff] %v1436
    $region45: #{tpu_custom_call.1} parent=1 // pred_fallthru
      _
    // Predicated region
    $region46: #{tpu_custom_call.1} parent=1 // pred_check
      %p1516 = pneg %p79
    $region47: #{tpu_custom_call.1} parent=1 // pred_check_branch
      %1518 = sbr.rel (%p1516) target = $region49
    $region48: #{tpu_custom_call.1} parent=1 // pred_region
      %v1519 = vld [vmem:[#allocation3] sm:$0xff]
      %s1520 = scalar_lea.vmem [#allocation2], %s273
      %v1521 = vld [vmem:[%s1520] sm:$0xff]
      %1522 = vmatprep.subr.mxu0 0.0
      %1523 = vmatpush1.msra.mxu0 %v255
      %1524 = vmatprep.subr.mxu0 0.0
      %1525 = vmatpush1.msra.mxu0 %v254
      %1526 = vmatprep.subr.mxu0 0.0
      %1527 = vmatpush1.msra.mxu0 %v253
      %1528 = vmatprep.subr.mxu0 0.0
      %1529 = vmatpush1.msra.mxu0 %v252
      %1530 = vmatprep.subr.mxu0 0.0
      %1531 = vmatpush1.msra.mxu0 %v251
      %1532 = vmatprep.subr.mxu0 0.0
      %1533 = vmatpush1.msra.mxu0 %v250
      %1534 = vmatprep.subr.mxu0 0.0
      %1535 = vmatpush1.msra.mxu0 %v249
      %1536 = vmatprep.subr.mxu0 0.0
      %1537 = vmatpush1.msra.mxu0 %v248
      %1538 = vmatprep.subr.mxu0 0.0
      %1539 = vmatpush1.msra.mxu0 %v247
      %1540 = vmatprep.subr.mxu0 0.0
      %1541 = vmatpush1.msra.mxu0 %v246
      %1542 = vmatprep.subr.mxu0 0.0
      %1543 = vmatpush1.msra.mxu0 %v245
      %1544 = vmatprep.subr.mxu0 0.0
      %1545 = vmatpush1.msra.mxu0 %v244
      %1546 = vmatprep.subr.mxu0 0.0
      %1547 = vmatpush1.msra.mxu0 %v243
      %1548 = vmatprep.subr.mxu0 0.0
      %1549 = vmatpush1.msra.mxu0 %v242
      %1550 = vmatprep.subr.mxu0 0.0
      %1551 = vmatpush1.msra.mxu0 %v241
      %1552 = vmatprep.subr.mxu0 0.0
      %1553 = vmatpush1.msra.mxu0 %v240
      %1554 = vmatprep.subr.mxu0 0.0
      %1555 = vmatpush2.msra.mxu0 0.0
      %1556 = vmatprep.subr.mxu0 0.0
      %1557 = vmatpush2.msra.mxu0 0.0
      %1558 = vmatprep.subr.mxu0 0.0
      %1559 = vmatpush2.msra.mxu0 0.0
      %1560 = vmatprep.subr.mxu0 0.0
      %1561 = vmatpush2.msra.mxu0 0.0
      %1562 = vmatprep.subr.mxu0 0.0
      %1563 = vmatpush2.msra.mxu0 0.0
      %1564 = vmatprep.subr.mxu0 0.0
      %1565 = vmatpush2.msra.mxu0 0.0
      %1566 = vmatprep.subr.mxu0 0.0
      %1567 = vmatpush2.msra.mxu0 0.0
      %1568 = vmatprep.subr.mxu0 0.0
      %1569 = vmatpush2.msra.mxu0 0.0
      %1570 = vmatprep.subr.mxu0 0.0
      %1571 = vmatpush2.msra.mxu0 0.0
      %1572 = vmatprep.subr.mxu0 0.0
      %1573 = vmatpush2.msra.mxu0 0.0
      %1574 = vmatprep.subr.mxu0 0.0
      %1575 = vmatpush2.msra.mxu0 0.0
      %1576 = vmatprep.subr.mxu0 0.0
      %1577 = vmatpush2.msra.mxu0 0.0
      %1578 = vmatprep.subr.mxu0 0.0
      %1579 = vmatpush2.msra.mxu0 0.0
      %1580 = vmatprep.subr.mxu0 0.0
      %1581 = vmatpush2.msra.mxu0 0.0
      %1582 = vmatprep.subr.mxu0 0.0
      %1583 = vmatpush2.msra.mxu0 0.0
      %1584 = vmatprep.subr.mxu0 0.0
      %1585 = vmatpush2.msra.mxu0 0.0
      %1586 = vmatprep.mubr.f32.mxu0 0.0
      %1587 = vmatmul.mubr.f32.gmra.mxu0 %v1519
      %v1588 = vpop.f32.mrf.mxu0
      %v1589 = vadd.f32 0.0, %v1588
      %v1590 = vpop.f32.mrf.mxu0
      %1591 = vdwg.mxu0
      %v1592 = vadd.f32 %v1521, %v1589
      %v1593 = vtanh.pop %v1592
      %s1594 = sadd.s32 %s273, 8
      %s1595 = scalar_lea.vmem [#allocation2], %s1594
      %v1596 = vld [vmem:[%s1595] sm:$0xff]
      %1597 = vmatprep.subr.mxu0 0.0
      %1598 = vmatpush1.msra.mxu0 %v255
      %1599 = vmatprep.subr.mxu0 0.0
      %1600 = vmatpush1.msra.mxu0 %v254
      %1601 = vmatprep.subr.mxu0 0.0
      %1602 = vmatpush1.msra.mxu0 %v253
      %1603 = vmatprep.subr.mxu0 0.0
      %1604 = vmatpush1.msra.mxu0 %v252
      %1605 = vmatprep.subr.mxu0 0.0
      %1606 = vmatpush1.msra.mxu0 %v251
      %1607 = vmatprep.subr.mxu0 0.0
      %1608 = vmatpush1.msra.mxu0 %v250
      %1609 = vmatprep.subr.mxu0 0.0
      %1610 = vmatpush1.msra.mxu0 %v249
      %1611 = vmatprep.subr.mxu0 0.0
      %1612 = vmatpush1.msra.mxu0 %v248
      %1613 = vmatprep.subr.mxu0 0.0
      %1614 = vmatpush1.msra.mxu0 %v247
      %1615 = vmatprep.subr.mxu0 0.0
      %1616 = vmatpush1.msra.mxu0 %v246
      %1617 = vmatprep.subr.mxu0 0.0
      %1618 = vmatpush1.msra.mxu0 %v245
      %1619 = vmatprep.subr.mxu0 0.0
      %1620 = vmatpush1.msra.mxu0 %v244
      %1621 = vmatprep.subr.mxu0 0.0
      %1622 = vmatpush1.msra.mxu0 %v243
      %1623 = vmatprep.subr.mxu0 0.0
      %1624 = vmatpush1.msra.mxu0 %v242
      %1625 = vmatprep.subr.mxu0 0.0
      %1626 = vmatpush1.msra.mxu0 %v241
      %1627 = vmatprep.subr.mxu0 0.0
      %1628 = vmatpush1.msra.mxu0 %v240
      %1629 = vmatprep.subr.mxu0 0.0
      %1630 = vmatpush2.msra.mxu0 0.0
      %1631 = vmatprep.subr.mxu0 0.0
      %1632 = vmatpush2.msra.mxu0 0.0
      %1633 = vmatprep.subr.mxu0 0.0
      %1634 = vmatpush2.msra.mxu0 0.0
      %1635 = vmatprep.subr.mxu0 0.0
      %1636 = vmatpush2.msra.mxu0 0.0
      %1637 = vmatprep.subr.mxu0 0.0
      %1638 = vmatpush2.msra.mxu0 0.0
      %1639 = vmatprep.subr.mxu0 0.0
      %1640 = vmatpush2.msra.mxu0 0.0
      %1641 = vmatprep.subr.mxu0 0.0
      %1642 = vmatpush2.msra.mxu0 0.0
      %1643 = vmatprep.subr.mxu0 0.0
      %1644 = vmatpush2.msra.mxu0 0.0
      %1645 = vmatprep.subr.mxu0 0.0
      %1646 = vmatpush2.msra.mxu0 0.0
      %1647 = vmatprep.subr.mxu0 0.0
      %1648 = vmatpush2.msra.mxu0 0.0
      %1649 = vmatprep.subr.mxu0 0.0
      %1650 = vmatpush2.msra.mxu0 0.0
      %1651 = vmatprep.subr.mxu0 0.0
      %1652 = vmatpush2.msra.mxu0 0.0
      %1653 = vmatprep.subr.mxu0 0.0
      %1654 = vmatpush2.msra.mxu0 0.0
      %1655 = vmatprep.subr.mxu0 0.0
      %1656 = vmatpush2.msra.mxu0 0.0
      %1657 = vmatprep.subr.mxu0 0.0
      %1658 = vmatpush2.msra.mxu0 0.0
      %1659 = vmatprep.subr.mxu0 0.0
      %1660 = vmatpush2.msra.mxu0 0.0
      %1661 = vmatprep.mubr.f32.mxu0 0.0
      %1662 = vmatmul.mubr.f32.gmra.mxu0 %v1593
      %v1663 = vpop.f32.mrf.mxu0
      %v1664 = vadd.f32 0.0, %v1663
      %v1665 = vpop.f32.mrf.mxu0
      %1666 = vdwg.mxu0
      %v1667 = vadd.f32 %v1596, %v1664
      %v1668 = vtanh.pop %v1667
      %s1669 = sadd.s32 %s273, 16
      %s1670 = scalar_lea.vmem [#allocation2], %s1669
      %v1671 = vld [vmem:[%s1670] sm:$0xff]
      %1672 = vmatprep.subr.mxu0 0.0
      %1673 = vmatpush1.msra.mxu0 %v255
      %1674 = vmatprep.subr.mxu0 0.0
      %1675 = vmatpush1.msra.mxu0 %v254
      %1676 = vmatprep.subr.mxu0 0.0
      %1677 = vmatpush1.msra.mxu0 %v253
      %1678 = vmatprep.subr.mxu0 0.0
      %1679 = vmatpush1.msra.mxu0 %v252
      %1680 = vmatprep.subr.mxu0 0.0
      %1681 = vmatpush1.msra.mxu0 %v251
      %1682 = vmatprep.subr.mxu0 0.0
      %1683 = vmatpush1.msra.mxu0 %v250
      %1684 = vmatprep.subr.mxu0 0.0
      %1685 = vmatpush1.msra.mxu0 %v249
      %1686 = vmatprep.subr.mxu0 0.0
      %1687 = vmatpush1.msra.mxu0 %v248
      %1688 = vmatprep.subr.mxu0 0.0
      %1689 = vmatpush1.msra.mxu0 %v247
      %1690 = vmatprep.subr.mxu0 0.0
      %1691 = vmatpush1.msra.mxu0 %v246
      %1692 = vmatprep.subr.mxu0 0.0
      %1693 = vmatpush1.msra.mxu0 %v245
      %1694 = vmatprep.subr.mxu0 0.0
      %1695 = vmatpush1.msra.mxu0 %v244
      %1696 = vmatprep.subr.mxu0 0.0
      %1697 = vmatpush1.msra.mxu0 %v243
      %1698 = vmatprep.subr.mxu0 0.0
      %1699 = vmatpush1.msra.mxu0 %v242
      %1700 = vmatprep.subr.mxu0 0.0
      %1701 = vmatpush1.msra.mxu0 %v241
      %1702 = vmatprep.subr.mxu0 0.0
      %1703 = vmatpush1.msra.mxu0 %v240
      %1704 = vmatprep.subr.mxu0 0.0
      %1705 = vmatpush2.msra.mxu0 0.0
      %1706 = vmatprep.subr.mxu0 0.0
      %1707 = vmatpush2.msra.mxu0 0.0
      %1708 = vmatprep.subr.mxu0 0.0
      %1709 = vmatpush2.msra.mxu0 0.0
      %1710 = vmatprep.subr.mxu0 0.0
      %1711 = vmatpush2.msra.mxu0 0.0
      %1712 = vmatprep.subr.mxu0 0.0
      %1713 = vmatpush2.msra.mxu0 0.0
      %1714 = vmatprep.subr.mxu0 0.0
      %1715 = vmatpush2.msra.mxu0 0.0
      %1716 = vmatprep.subr.mxu0 0.0
      %1717 = vmatpush2.msra.mxu0 0.0
      %1718 = vmatprep.subr.mxu0 0.0
      %1719 = vmatpush2.msra.mxu0 0.0
      %1720 = vmatprep.subr.mxu0 0.0
      %1721 = vmatpush2.msra.mxu0 0.0
      %1722 = vmatprep.subr.mxu0 0.0
      %1723 = vmatpush2.msra.mxu0 0.0
      %1724 = vmatprep.subr.mxu0 0.0
      %1725 = vmatpush2.msra.mxu0 0.0
      %1726 = vmatprep.subr.mxu0 0.0
      %1727 = vmatpush2.msra.mxu0 0.0
      %1728 = vmatprep.subr.mxu0 0.0
      %1729 = vmatpush2.msra.mxu0 0.0
      %1730 = vmatprep.subr.mxu0 0.0
      %1731 = vmatpush2.msra.mxu0 0.0
      %1732 = vmatprep.subr.mxu0 0.0
      %1733 = vmatpush2.msra.mxu0 0.0
      %1734 = vmatprep.subr.mxu0 0.0
      %1735 = vmatpush2.msra.mxu0 0.0
      %1736 = vmatprep.mubr.f32.mxu0 0.0
      %1737 = vmatmul.mubr.f32.gmra.mxu0 %v1668
      %v1738 = vpop.f32.mrf.mxu0
      %v1739 = vadd.f32 0.0, %v1738
      %v1740 = vpop.f32.mrf.mxu0
      %1741 = vdwg.mxu0
      %v1742 = vadd.f32 %v1671, %v1739
      %v1743 = vtanh.pop %v1742
      %s1744 = sadd.s32 %s273, 24
      %s1745 = scalar_lea.vmem [#allocation2], %s1744
      %v1746 = vld [vmem:[%s1745] sm:$0xff]
      %1747 = vmatprep.subr.mxu0 0.0
      %1748 = vmatpush1.msra.mxu0 %v255
      %1749 = vmatprep.subr.mxu0 0.0
      %1750 = vmatpush1.msra.mxu0 %v254
      %1751 = vmatprep.subr.mxu0 0.0
      %1752 = vmatpush1.msra.mxu0 %v253
      %1753 = vmatprep.subr.mxu0 0.0
      %1754 = vmatpush1.msra.mxu0 %v252
      %1755 = vmatprep.subr.mxu0 0.0
      %1756 = vmatpush1.msra.mxu0 %v251
      %1757 = vmatprep.subr.mxu0 0.0
      %1758 = vmatpush1.msra.mxu0 %v250
      %1759 = vmatprep.subr.mxu0 0.0
      %1760 = vmatpush1.msra.mxu0 %v249
      %1761 = vmatprep.subr.mxu0 0.0
      %1762 = vmatpush1.msra.mxu0 %v248
      %1763 = vmatprep.subr.mxu0 0.0
      %1764 = vmatpush1.msra.mxu0 %v247
      %1765 = vmatprep.subr.mxu0 0.0
      %1766 = vmatpush1.msra.mxu0 %v246
      %1767 = vmatprep.subr.mxu0 0.0
      %1768 = vmatpush1.msra.mxu0 %v245
      %1769 = vmatprep.subr.mxu0 0.0
      %1770 = vmatpush1.msra.mxu0 %v244
      %1771 = vmatprep.subr.mxu0 0.0
      %1772 = vmatpush1.msra.mxu0 %v243
      %1773 = vmatprep.subr.mxu0 0.0
      %1774 = vmatpush1.msra.mxu0 %v242
      %1775 = vmatprep.subr.mxu0 0.0
      %1776 = vmatpush1.msra.mxu0 %v241
      %1777 = vmatprep.subr.mxu0 0.0
      %1778 = vmatpush1.msra.mxu0 %v240
      %1779 = vmatprep.subr.mxu0 0.0
      %1780 = vmatpush2.msra.mxu0 0.0
      %1781 = vmatprep.subr.mxu0 0.0
      %1782 = vmatpush2.msra.mxu0 0.0
      %1783 = vmatprep.subr.mxu0 0.0
      %1784 = vmatpush2.msra.mxu0 0.0
      %1785 = vmatprep.subr.mxu0 0.0
      %1786 = vmatpush2.msra.mxu0 0.0
      %1787 = vmatprep.subr.mxu0 0.0
      %1788 = vmatpush2.msra.mxu0 0.0
      %1789 = vmatprep.subr.mxu0 0.0
      %1790 = vmatpush2.msra.mxu0 0.0
      %1791 = vmatprep.subr.mxu0 0.0
      %1792 = vmatpush2.msra.mxu0 0.0
      %1793 = vmatprep.subr.mxu0 0.0
      %1794 = vmatpush2.msra.mxu0 0.0
      %1795 = vmatprep.subr.mxu0 0.0
      %1796 = vmatpush2.msra.mxu0 0.0
      %1797 = vmatprep.subr.mxu0 0.0
      %1798 = vmatpush2.msra.mxu0 0.0
      %1799 = vmatprep.subr.mxu0 0.0
      %1800 = vmatpush2.msra.mxu0 0.0
      %1801 = vmatprep.subr.mxu0 0.0
      %1802 = vmatpush2.msra.mxu0 0.0
      %1803 = vmatprep.subr.mxu0 0.0
      %1804 = vmatpush2.msra.mxu0 0.0
      %1805 = vmatprep.subr.mxu0 0.0
      %1806 = vmatpush2.msra.mxu0 0.0
      %1807 = vmatprep.subr.mxu0 0.0
      %1808 = vmatpush2.msra.mxu0 0.0
      %1809 = vmatprep.subr.mxu0 0.0
      %1810 = vmatpush2.msra.mxu0 0.0
      %1811 = vmatprep.mubr.f32.mxu0 0.0
      %1812 = vmatmul.mubr.f32.gmra.mxu0 %v1743
      %v1813 = vpop.f32.mrf.mxu0
      %v1814 = vadd.f32 0.0, %v1813
      %v1815 = vpop.f32.mrf.mxu0
      %1816 = vdwg.mxu0
      %v1817 = vadd.f32 %v1746, %v1814
      %v1818 = vtanh.pop %v1817
      %s1819 = sadd.s32 %s273, 32
      %s1820 = scalar_lea.vmem [#allocation2], %s1819
      %v1821 = vld [vmem:[%s1820] sm:$0xff]
      %1822 = vmatprep.subr.mxu0 0.0
      %1823 = vmatpush1.msra.mxu0 %v255
      %1824 = vmatprep.subr.mxu0 0.0
      %1825 = vmatpush1.msra.mxu0 %v254
      %1826 = vmatprep.subr.mxu0 0.0
      %1827 = vmatpush1.msra.mxu0 %v253
      %1828 = vmatprep.subr.mxu0 0.0
      %1829 = vmatpush1.msra.mxu0 %v252
      %1830 = vmatprep.subr.mxu0 0.0
      %1831 = vmatpush1.msra.mxu0 %v251
      %1832 = vmatprep.subr.mxu0 0.0
      %1833 = vmatpush1.msra.mxu0 %v250
      %1834 = vmatprep.subr.mxu0 0.0
      %1835 = vmatpush1.msra.mxu0 %v249
      %1836 = vmatprep.subr.mxu0 0.0
      %1837 = vmatpush1.msra.mxu0 %v248
      %1838 = vmatprep.subr.mxu0 0.0
      %1839 = vmatpush1.msra.mxu0 %v247
      %1840 = vmatprep.subr.mxu0 0.0
      %1841 = vmatpush1.msra.mxu0 %v246
      %1842 = vmatprep.subr.mxu0 0.0
      %1843 = vmatpush1.msra.mxu0 %v245
      %1844 = vmatprep.subr.mxu0 0.0
      %1845 = vmatpush1.msra.mxu0 %v244
      %1846 = vmatprep.subr.mxu0 0.0
      %1847 = vmatpush1.msra.mxu0 %v243
      %1848 = vmatprep.subr.mxu0 0.0
      %1849 = vmatpush1.msra.mxu0 %v242
      %1850 = vmatprep.subr.mxu0 0.0
      %1851 = vmatpush1.msra.mxu0 %v241
      %1852 = vmatprep.subr.mxu0 0.0
      %1853 = vmatpush1.msra.mxu0 %v240
      %1854 = vmatprep.subr.mxu0 0.0
      %1855 = vmatpush2.msra.mxu0 0.0
      %1856 = vmatprep.subr.mxu0 0.0
      %1857 = vmatpush2.msra.mxu0 0.0
      %1858 = vmatprep.subr.mxu0 0.0
      %1859 = vmatpush2.msra.mxu0 0.0
      %1860 = vmatprep.subr.mxu0 0.0
      %1861 = vmatpush2.msra.mxu0 0.0
      %1862 = vmatprep.subr.mxu0 0.0
      %1863 = vmatpush2.msra.mxu0 0.0
      %1864 = vmatprep.subr.mxu0 0.0
      %1865 = vmatpush2.msra.mxu0 0.0
      %1866 = vmatprep.subr.mxu0 0.0
      %1867 = vmatpush2.msra.mxu0 0.0
      %1868 = vmatprep.subr.mxu0 0.0
      %1869 = vmatpush2.msra.mxu0 0.0
      %1870 = vmatprep.subr.mxu0 0.0
      %1871 = vmatpush2.msra.mxu0 0.0
      %1872 = vmatprep.subr.mxu0 0.0
      %1873 = vmatpush2.msra.mxu0 0.0
      %1874 = vmatprep.subr.mxu0 0.0
      %1875 = vmatpush2.msra.mxu0 0.0
      %1876 = vmatprep.subr.mxu0 0.0
      %1877 = vmatpush2.msra.mxu0 0.0
      %1878 = vmatprep.subr.mxu0 0.0
      %1879 = vmatpush2.msra.mxu0 0.0
      %1880 = vmatprep.subr.mxu0 0.0
      %1881 = vmatpush2.msra.mxu0 0.0
      %1882 = vmatprep.subr.mxu0 0.0
      %1883 = vmatpush2.msra.mxu0 0.0
      %1884 = vmatprep.subr.mxu0 0.0
      %1885 = vmatpush2.msra.mxu0 0.0
      %1886 = vmatprep.mubr.f32.mxu0 0.0
      %1887 = vmatmul.mubr.f32.gmra.mxu0 %v1818
      %v1888 = vpop.f32.mrf.mxu0
      %v1889 = vadd.f32 0.0, %v1888
      %v1890 = vpop.f32.mrf.mxu0
      %1891 = vdwg.mxu0
      %v1892 = vadd.f32 %v1821, %v1889
      %v1893 = vtanh.pop %v1892
      %s1894 = sadd.s32 %s273, 40
      %s1895 = scalar_lea.vmem [#allocation2], %s1894
      %v1896 = vld [vmem:[%s1895] sm:$0xff]
      %1897 = vmatprep.subr.mxu0 0.0
      %1898 = vmatpush1.msra.mxu0 %v255
      %1899 = vmatprep.subr.mxu0 0.0
      %1900 = vmatpush1.msra.mxu0 %v254
      %1901 = vmatprep.subr.mxu0 0.0
      %1902 = vmatpush1.msra.mxu0 %v253
      %1903 = vmatprep.subr.mxu0 0.0
      %1904 = vmatpush1.msra.mxu0 %v252
      %1905 = vmatprep.subr.mxu0 0.0
      %1906 = vmatpush1.msra.mxu0 %v251
      %1907 = vmatprep.subr.mxu0 0.0
      %1908 = vmatpush1.msra.mxu0 %v250
      %1909 = vmatprep.subr.mxu0 0.0
      %1910 = vmatpush1.msra.mxu0 %v249
      %1911 = vmatprep.subr.mxu0 0.0
      %1912 = vmatpush1.msra.mxu0 %v248
      %1913 = vmatprep.subr.mxu0 0.0
      %1914 = vmatpush1.msra.mxu0 %v247
      %1915 = vmatprep.subr.mxu0 0.0
      %1916 = vmatpush1.msra.mxu0 %v246
      %1917 = vmatprep.subr.mxu0 0.0
      %1918 = vmatpush1.msra.mxu0 %v245
      %1919 = vmatprep.subr.mxu0 0.0
      %1920 = vmatpush1.msra.mxu0 %v244
      %1921 = vmatprep.subr.mxu0 0.0
      %1922 = vmatpush1.msra.mxu0 %v243
      %1923 = vmatprep.subr.mxu0 0.0
      %1924 = vmatpush1.msra.mxu0 %v242
      %1925 = vmatprep.subr.mxu0 0.0
      %1926 = vmatpush1.msra.mxu0 %v241
      %1927 = vmatprep.subr.mxu0 0.0
      %1928 = vmatpush1.msra.mxu0 %v240
      %1929 = vmatprep.subr.mxu0 0.0
      %1930 = vmatpush2.msra.mxu0 0.0
      %1931 = vmatprep.subr.mxu0 0.0
      %1932 = vmatpush2.msra.mxu0 0.0
      %1933 = vmatprep.subr.mxu0 0.0
      %1934 = vmatpush2.msra.mxu0 0.0
      %1935 = vmatprep.subr.mxu0 0.0
      %1936 = vmatpush2.msra.mxu0 0.0
      %1937 = vmatprep.subr.mxu0 0.0
      %1938 = vmatpush2.msra.mxu0 0.0
      %1939 = vmatprep.subr.mxu0 0.0
      %1940 = vmatpush2.msra.mxu0 0.0
      %1941 = vmatprep.subr.mxu0 0.0
      %1942 = vmatpush2.msra.mxu0 0.0
      %1943 = vmatprep.subr.mxu0 0.0
      %1944 = vmatpush2.msra.mxu0 0.0
      %1945 = vmatprep.subr.mxu0 0.0
      %1946 = vmatpush2.msra.mxu0 0.0
      %1947 = vmatprep.subr.mxu0 0.0
      %1948 = vmatpush2.msra.mxu0 0.0
      %1949 = vmatprep.subr.mxu0 0.0
      %1950 = vmatpush2.msra.mxu0 0.0
      %1951 = vmatprep.subr.mxu0 0.0
      %1952 = vmatpush2.msra.mxu0 0.0
      %1953 = vmatprep.subr.mxu0 0.0
      %1954 = vmatpush2.msra.mxu0 0.0
      %1955 = vmatprep.subr.mxu0 0.0
      %1956 = vmatpush2.msra.mxu0 0.0
      %1957 = vmatprep.subr.mxu0 0.0
      %1958 = vmatpush2.msra.mxu0 0.0
      %1959 = vmatprep.subr.mxu0 0.0
      %1960 = vmatpush2.msra.mxu0 0.0
      %1961 = vmatprep.mubr.f32.mxu0 0.0
      %1962 = vmatmul.mubr.f32.gmra.mxu0 %v1893
      %v1963 = vpop.f32.mrf.mxu0
      %v1964 = vadd.f32 0.0, %v1963
      %v1965 = vpop.f32.mrf.mxu0
      %1966 = vdwg.mxu0
      %v1967 = vadd.f32 %v1896, %v1964
      %v1968 = vtanh.pop %v1967
      %s1969 = sadd.s32 %s273, 48
      %s1970 = scalar_lea.vmem [#allocation2], %s1969
      %v1971 = vld [vmem:[%s1970] sm:$0xff]
      %1972 = vmatprep.subr.mxu0 0.0
      %1973 = vmatpush1.msra.mxu0 %v255
      %1974 = vmatprep.subr.mxu0 0.0
      %1975 = vmatpush1.msra.mxu0 %v254
      %1976 = vmatprep.subr.mxu0 0.0
      %1977 = vmatpush1.msra.mxu0 %v253
      %1978 = vmatprep.subr.mxu0 0.0
      %1979 = vmatpush1.msra.mxu0 %v252
      %1980 = vmatprep.subr.mxu0 0.0
      %1981 = vmatpush1.msra.mxu0 %v251
      %1982 = vmatprep.subr.mxu0 0.0
      %1983 = vmatpush1.msra.mxu0 %v250
      %1984 = vmatprep.subr.mxu0 0.0
      %1985 = vmatpush1.msra.mxu0 %v249
      %1986 = vmatprep.subr.mxu0 0.0
      %1987 = vmatpush1.msra.mxu0 %v248
      %1988 = vmatprep.subr.mxu0 0.0
      %1989 = vmatpush1.msra.mxu0 %v247
      %1990 = vmatprep.subr.mxu0 0.0
      %1991 = vmatpush1.msra.mxu0 %v246
      %1992 = vmatprep.subr.mxu0 0.0
      %1993 = vmatpush1.msra.mxu0 %v245
      %1994 = vmatprep.subr.mxu0 0.0
      %1995 = vmatpush1.msra.mxu0 %v244
      %1996 = vmatprep.subr.mxu0 0.0
      %1997 = vmatpush1.msra.mxu0 %v243
      %1998 = vmatprep.subr.mxu0 0.0
      %1999 = vmatpush1.msra.mxu0 %v242
      %2000 = vmatprep.subr.mxu0 0.0
      %2001 = vmatpush1.msra.mxu0 %v241
      %2002 = vmatprep.subr.mxu0 0.0
      %2003 = vmatpush1.msra.mxu0 %v240
      %2004 = vmatprep.subr.mxu0 0.0
      %2005 = vmatpush2.msra.mxu0 0.0
      %2006 = vmatprep.subr.mxu0 0.0
      %2007 = vmatpush2.msra.mxu0 0.0
      %2008 = vmatprep.subr.mxu0 0.0
      %2009 = vmatpush2.msra.mxu0 0.0
      %2010 = vmatprep.subr.mxu0 0.0
      %2011 = vmatpush2.msra.mxu0 0.0
      %2012 = vmatprep.subr.mxu0 0.0
      %2013 = vmatpush2.msra.mxu0 0.0
      %2014 = vmatprep.subr.mxu0 0.0
      %2015 = vmatpush2.msra.mxu0 0.0
      %2016 = vmatprep.subr.mxu0 0.0
      %2017 = vmatpush2.msra.mxu0 0.0
      %2018 = vmatprep.subr.mxu0 0.0
      %2019 = vmatpush2.msra.mxu0 0.0
      %2020 = vmatprep.subr.mxu0 0.0
      %2021 = vmatpush2.msra.mxu0 0.0
      %2022 = vmatprep.subr.mxu0 0.0
      %2023 = vmatpush2.msra.mxu0 0.0
      %2024 = vmatprep.subr.mxu0 0.0
      %2025 = vmatpush2.msra.mxu0 0.0
      %2026 = vmatprep.subr.mxu0 0.0
      %2027 = vmatpush2.msra.mxu0 0.0
      %2028 = vmatprep.subr.mxu0 0.0
      %2029 = vmatpush2.msra.mxu0 0.0
      %2030 = vmatprep.subr.mxu0 0.0
      %2031 = vmatpush2.msra.mxu0 0.0
      %2032 = vmatprep.subr.mxu0 0.0
      %2033 = vmatpush2.msra.mxu0 0.0
      %2034 = vmatprep.subr.mxu0 0.0
      %2035 = vmatpush2.msra.mxu0 0.0
      %2036 = vmatprep.mubr.f32.mxu0 0.0
      %2037 = vmatmul.mubr.f32.gmra.mxu0 %v1968
      %v2038 = vpop.f32.mrf.mxu0
      %v2039 = vadd.f32 0.0, %v2038
      %v2040 = vpop.f32.mrf.mxu0
      %2041 = vdwg.mxu0
      %v2042 = vadd.f32 %v1971, %v2039
      %v2043 = vtanh.pop %v2042
      %s2044 = sadd.s32 %s273, 56
      %s2045 = scalar_lea.vmem [#allocation2], %s2044
      %v2046 = vld [vmem:[%s2045] sm:$0xff]
      %2047 = vmatprep.subr.mxu0 0.0
      %2048 = vmatpush1.msra.mxu0 %v255
      %2049 = vmatprep.subr.mxu0 0.0
      %2050 = vmatpush1.msra.mxu0 %v254
      %2051 = vmatprep.subr.mxu0 0.0
      %2052 = vmatpush1.msra.mxu0 %v253
      %2053 = vmatprep.subr.mxu0 0.0
      %2054 = vmatpush1.msra.mxu0 %v252
      %2055 = vmatprep.subr.mxu0 0.0
      %2056 = vmatpush1.msra.mxu0 %v251
      %2057 = vmatprep.subr.mxu0 0.0
      %2058 = vmatpush1.msra.mxu0 %v250
      %2059 = vmatprep.subr.mxu0 0.0
      %2060 = vmatpush1.msra.mxu0 %v249
      %2061 = vmatprep.subr.mxu0 0.0
      %2062 = vmatpush1.msra.mxu0 %v248
      %2063 = vmatprep.subr.mxu0 0.0
      %2064 = vmatpush1.msra.mxu0 %v247
      %2065 = vmatprep.subr.mxu0 0.0
      %2066 = vmatpush1.msra.mxu0 %v246
      %2067 = vmatprep.subr.mxu0 0.0
      %2068 = vmatpush1.msra.mxu0 %v245
      %2069 = vmatprep.subr.mxu0 0.0
      %2070 = vmatpush1.msra.mxu0 %v244
      %2071 = vmatprep.subr.mxu0 0.0
      %2072 = vmatpush1.msra.mxu0 %v243
      %2073 = vmatprep.subr.mxu0 0.0
      %2074 = vmatpush1.msra.mxu0 %v242
      %2075 = vmatprep.subr.mxu0 0.0
      %2076 = vmatpush1.msra.mxu0 %v241
      %2077 = vmatprep.subr.mxu0 0.0
      %2078 = vmatpush1.msra.mxu0 %v240
      %2079 = vmatprep.subr.mxu0 0.0
      %2080 = vmatpush2.msra.mxu0 0.0
      %2081 = vmatprep.subr.mxu0 0.0
      %2082 = vmatpush2.msra.mxu0 0.0
      %2083 = vmatprep.subr.mxu0 0.0
      %2084 = vmatpush2.msra.mxu0 0.0
      %2085 = vmatprep.subr.mxu0 0.0
      %2086 = vmatpush2.msra.mxu0 0.0
      %2087 = vmatprep.subr.mxu0 0.0
      %2088 = vmatpush2.msra.mxu0 0.0
      %2089 = vmatprep.subr.mxu0 0.0
      %2090 = vmatpush2.msra.mxu0 0.0
      %2091 = vmatprep.subr.mxu0 0.0
      %2092 = vmatpush2.msra.mxu0 0.0
      %2093 = vmatprep.subr.mxu0 0.0
      %2094 = vmatpush2.msra.mxu0 0.0
      %2095 = vmatprep.subr.mxu0 0.0
      %2096 = vmatpush2.msra.mxu0 0.0
      %2097 = vmatprep.subr.mxu0 0.0
      %2098 = vmatpush2.msra.mxu0 0.0
      %2099 = vmatprep.subr.mxu0 0.0
      %2100 = vmatpush2.msra.mxu0 0.0
      %2101 = vmatprep.subr.mxu0 0.0
      %2102 = vmatpush2.msra.mxu0 0.0
      %2103 = vmatprep.subr.mxu0 0.0
      %2104 = vmatpush2.msra.mxu0 0.0
      %2105 = vmatprep.subr.mxu0 0.0
      %2106 = vmatpush2.msra.mxu0 0.0
      %2107 = vmatprep.subr.mxu0 0.0
      %2108 = vmatpush2.msra.mxu0 0.0
      %2109 = vmatprep.subr.mxu0 0.0
      %2110 = vmatpush2.msra.mxu0 0.0
      %2111 = vmatprep.mubr.f32.mxu0 0.0
      %2112 = vmatmul.mubr.f32.gmra.mxu0 %v2043
      %v2113 = vpop.f32.mrf.mxu0
      %v2114 = vadd.f32 0.0, %v2113
      %v2115 = vpop.f32.mrf.mxu0
      %2116 = vdwg.mxu0
      %v2117 = vadd.f32 %v2046, %v2114
      %v2118 = vtanh.pop %v2117
      %2119 = vst [vmem:[#allocation3] sm:$0xff] %v2118
      %v2120 = vld [vmem:[#allocation3] sm:$0xff]
      %2121 = vst [vmem:[#allocation8] sm:$0xff] %v2120
      %v2122 = vld [vmem:[#allocation4] sm:$0xff]
      %v2123 = vld [vmem:[#allocation4 + $0x8] sm:$0xff]
      %v2124 = vld [vmem:[#allocation4 + $0x10] sm:$0xff]
      %v2125 = vld [vmem:[#allocation4 + $0x18] sm:$0xff]
      %v2126 = vld [vmem:[#allocation4 + $0x20] sm:$0xff]
      %v2127 = vld [vmem:[#allocation4 + $0x28] sm:$0xff]
      %v2128 = vld [vmem:[#allocation4 + $0x30] sm:$0xff]
      %v2129 = vld [vmem:[#allocation4 + $0x38] sm:$0xff]
      %v2130 = vld [vmem:[#allocation4 + $0x40] sm:$0xff]
      %v2131 = vld [vmem:[#allocation4 + $0x48] sm:$0xff]
      %v2132 = vld [vmem:[#allocation4 + $0x50] sm:$0xff]
      %v2133 = vld [vmem:[#allocation4 + $0x58] sm:$0xff]
      %v2134 = vld [vmem:[#allocation4 + $0x60] sm:$0xff]
      %v2135 = vld [vmem:[#allocation4 + $0x68] sm:$0xff]
      %v2136 = vld [vmem:[#allocation4 + $0x70] sm:$0xff]
      %v2137 = vld [vmem:[#allocation4 + $0x78] sm:$0xff]
      %v2138 = vld [vmem:[%s6] sm:$0x1]
      %v2140 = vlaneseq
      %v2141 = vshrl.u32 %v2140, 7
      %v2142 = vsub.s32 0, %v2141
      %v2143 = vrot.slane %v2138, %v2142
      %2145 = vmatprep.subr.mxu0 0.0
      %2146 = vmatpush1.msra.mxu0 %v2137
      %2147 = vmatprep.subr.mxu0 0.0
      %2148 = vmatpush1.msra.mxu0 %v2136
      %2149 = vmatprep.subr.mxu0 0.0
      %2150 = vmatpush1.msra.mxu0 %v2135
      %2151 = vmatprep.subr.mxu0 0.0
      %2152 = vmatpush1.msra.mxu0 %v2134
      %2153 = vmatprep.subr.mxu0 0.0
      %2154 = vmatpush1.msra.mxu0 %v2133
      %2155 = vmatprep.subr.mxu0 0.0
      %2156 = vmatpush1.msra.mxu0 %v2132
      %2157 = vmatprep.subr.mxu0 0.0
      %2158 = vmatpush1.msra.mxu0 %v2131
      %2159 = vmatprep.subr.mxu0 0.0
      %2160 = vmatpush1.msra.mxu0 %v2130
      %2161 = vmatprep.subr.mxu0 0.0
      %2162 = vmatpush1.msra.mxu0 %v2129
      %2163 = vmatprep.subr.mxu0 0.0
      %2164 = vmatpush1.msra.mxu0 %v2128
      %2165 = vmatprep.subr.mxu0 0.0
      %2166 = vmatpush1.msra.mxu0 %v2127
      %2167 = vmatprep.subr.mxu0 0.0
      %2168 = vmatpush1.msra.mxu0 %v2126
      %2169 = vmatprep.subr.mxu0 0.0
      %2170 = vmatpush1.msra.mxu0 %v2125
      %2171 = vmatprep.subr.mxu0 0.0
      %2172 = vmatpush1.msra.mxu0 %v2124
      %2173 = vmatprep.subr.mxu0 0.0
      %2174 = vmatpush1.msra.mxu0 %v2123
      %2175 = vmatprep.subr.mxu0 0.0
      %2176 = vmatpush1.msra.mxu0 %v2122
      %2177 = vmatprep.subr.mxu0 0.0
      %2178 = vmatpush2.msra.mxu0 0.0
      %2179 = vmatprep.subr.mxu0 0.0
      %2180 = vmatpush2.msra.mxu0 0.0
      %2181 = vmatprep.subr.mxu0 0.0
      %2182 = vmatpush2.msra.mxu0 0.0
      %2183 = vmatprep.subr.mxu0 0.0
      %2184 = vmatpush2.msra.mxu0 0.0
      %2185 = vmatprep.subr.mxu0 0.0
      %2186 = vmatpush2.msra.mxu0 0.0
      %2187 = vmatprep.subr.mxu0 0.0
      %2188 = vmatpush2.msra.mxu0 0.0
      %2189 = vmatprep.subr.mxu0 0.0
      %2190 = vmatpush2.msra.mxu0 0.0
      %2191 = vmatprep.subr.mxu0 0.0
      %2192 = vmatpush2.msra.mxu0 0.0
      %2193 = vmatprep.subr.mxu0 0.0
      %2194 = vmatpush2.msra.mxu0 0.0
      %2195 = vmatprep.subr.mxu0 0.0
      %2196 = vmatpush2.msra.mxu0 0.0
      %2197 = vmatprep.subr.mxu0 0.0
      %2198 = vmatpush2.msra.mxu0 0.0
      %2199 = vmatprep.subr.mxu0 0.0
      %2200 = vmatpush2.msra.mxu0 0.0
      %2201 = vmatprep.subr.mxu0 0.0
      %2202 = vmatpush2.msra.mxu0 0.0
      %2203 = vmatprep.subr.mxu0 0.0
      %2204 = vmatpush2.msra.mxu0 0.0
      %2205 = vmatprep.subr.mxu0 0.0
      %2206 = vmatpush2.msra.mxu0 0.0
      %2207 = vmatprep.subr.mxu0 0.0
      %2208 = vmatpush2.msra.mxu0 0.0
      %2209 = vmatprep.mubr.f32.mxu0 0.0
      %2210 = vmatmul.mubr.f32.gmra.mxu0 %v2120
      %v2211 = vpop.f32.mrf.mxu0
      %v2212 = vadd.f32 %v2143, %v2211
      %v2213 = vpop.f32.mrf.mxu0
      %2214 = vdwg.mxu0
      %v2215 = vmax.f32 %v2212, 0.0
      %v2216 = vmin.f32 %v2215, 5.0
      %2217 = vst [vmem:[#allocation7] sm:$0xff] %v2216
    $region49: #{tpu_custom_call.1} parent=1 // pred_fallthru
      _
    // Predicated region
    $region50: #{tpu_custom_call.1} parent=1 // pred_check
      _
    $region51: #{tpu_custom_call.1} parent=1 // pred_check_branch
      %2219 = sbr.rel (0) target = $region53
    $region52: #{tpu_custom_call.1} parent=1 // pred_region
      %s2221 = ssub.s32 128, 128
      %2222 = vsyncadd [#allocation6], %s2221
      %s2224 = sshll.u32 [#allocation7], 4
      %s2225 = int_to_ptr.vmem [resolvable:$true] %s2224
      %2227 = dma.vmem_to_hbm [thread:$0]  %s2225, 128, %s8, [#allocation6]
    $region53: #{tpu_custom_call.1} parent=1 // pred_fallthru
      _
    // Predicated region
    $region54: #{tpu_custom_call.1} parent=1 // pred_check
      _
    $region55: #{tpu_custom_call.1} parent=1 // pred_check_branch
      %2229 = sbr.rel (0) target = $region57
    $region56: #{tpu_custom_call.1} parent=1 // pred_region
      %s2231 = ssub.s32 128, 128
      %2232 = vsyncadd [#allocation9], %s2231
      %s2234 = sshll.u32 [#allocation8], 4
      %s2235 = int_to_ptr.vmem [resolvable:$true] %s2234
      %2237 = dma.vmem_to_hbm [thread:$0]  %s2235, 128, %s9, [#allocation9]
    $region57: #{tpu_custom_call.1} parent=1 // pred_fallthru
      _
    // Predicated region
    $region58: #{tpu_custom_call.1} parent=1 // pred_check
      _
    $region59: #{tpu_custom_call.1} parent=1 // pred_check_branch
      %2239 = sbr.rel (0) target = $region61
    $region60: #{tpu_custom_call.1} parent=1 // pred_region
      %2240 = dma.done [#allocation6], 128
    $region61: #{tpu_custom_call.1} parent=1 // pred_fallthru
      _
    // Predicated region
    $region62: #{tpu_custom_call.1} parent=1 // pred_check
      _
    $region63: #{tpu_custom_call.1} parent=1 // pred_check_branch
      %2242 = sbr.rel (0) target = $region65
    $region64: #{tpu_custom_call.1} parent=1 // pred_region
      %2243 = dma.done [#allocation9], 128
    $region65: #{tpu_custom_call.1} parent=1 // pred_fallthru
      _
    %2244 = vsyncpa [#allocation5], 1
    %2245 = vsyncpa [#allocation6], 1
    %2246 = vsyncpa [#allocation9], 1

</llo_original>
